<compile_context>
chip_gen: v7x
topology: tpu7x:2x2x1
jax: 0.10.0
libtpu: 0.0.40
codegen_flags: <defaults>
</compile_context>

<pallas_src>
import numpy as np
import jax
import jax.numpy as jnp
from jax.experimental import pallas as pl
from jax.experimental.pallas import tpu as pltpu

EPS = 1e-5


def _full_spec(shape):
    ndim = len(shape)
    return pl.BlockSpec(shape, lambda i: (0,) * ndim)


# --------------------------------------------------------------------------------------
# Fused kernel: conv1 + BN1 + time-emb add + conv2 + BN2 + stride-2 transform conv.
# All operands / intermediates are lane-dense 2-D slabs:
#   x        : (N*H, W*Cin)
#   hidden h : (N*H, W*Cout)   (128 lanes for the test shapes)
#   output y : (N*Ho, Wo*Cout)
# --------------------------------------------------------------------------------------
def fused_block_kernel(x_ref, t_ref, rsel_ref, wbd1_ref, b1_ref, wt_ref, bt_ref,
                       g1_ref, be1_ref, wbd2_ref, b2_ref, g2_ref, be2_ref,
                       ssel_ref, wbd4_ref, b4_ref, p_ref, o_ref):
    f32 = jnp.float32

    def conv3x3(inp, wbd_ref, b_ref):
        # dh = 1 is the identity row shift; dh = 0 / 2 use the constant row selectors
        # (which also realize the zero padding along H).  Width window + W padding are
        # baked into the block-banded weights, so each tap is one K=W*C matmul.
        acc = jnp.dot(inp, wbd_ref[1], preferred_element_type=f32)
        r0 = jnp.dot(rsel_ref[0], inp, preferred_element_type=f32)
        acc = acc + jnp.dot(r0, wbd_ref[0], preferred_element_type=f32)
        r2 = jnp.dot(rsel_ref[1], inp, preferred_element_type=f32)
        acc = acc + jnp.dot(r2, wbd_ref[2], preferred_element_type=f32)
        return acc + b_ref[...]

    def relu_bn(pre, g_ref, be_ref):
        h = jnp.maximum(pre, 0.0)
        # Single-pass batch statistics: sum and sum-of-squares over rows, then one
        # matmul with the constant per-channel averaging matrix (also broadcasts the
        # per-channel stats back across the W lane groups).
        s = jnp.sum(h, axis=0, keepdims=True)
        sq = jnp.sum(h * h, axis=0, keepdims=True)
        mean = jnp.dot(s, p_ref[...], preferred_element_type=f32)
        ex2 = jnp.dot(sq, p_ref[...], preferred_element_type=f32)
        var = ex2 - mean * mean                       # biased variance (training mode)
        return (h - mean) * jax.lax.rsqrt(var + EPS) * g_ref[...] + be_ref[...]

    # ---- stage 1: h = BN1(relu(conv1(x))) + relu(time_mlp(t)) broadcast over (H, W)
    x = x_ref[...]                                                    # (N*H, W*Cin)
    h = relu_bn(conv3x3(x, wbd1_ref, b1_ref), g1_ref, be1_ref)        # (N*H, W*Cout)

    te = jnp.dot(t_ref[...], wt_ref[...], preferred_element_type=f32) + bt_ref[...]
    te = jnp.maximum(te, 0.0)                                         # (N, W*Cout) lane-tiled
    n = t_ref.shape[0]
    nh, lanes = h.shape
    h = (h.reshape(n, nh // n, lanes) + te[:, None, :]).reshape(nh, lanes)

    # ---- stage 2: h = BN2(relu(conv2(h)))
    h = relu_bn(conv3x3(h, wbd2_ref, b2_ref), g2_ref, be2_ref)        # (N*H, W*Cout)

    # ---- stage 3: transform = Conv2d(out_ch, out_ch, 4, stride=2, padding=1)
    # Row selectors implement the stride-2 H phase decomposition (+ H padding);
    # the banded weights implement the 4-wide, stride-2 W window (+ W padding).
    y = jnp.dot(jnp.dot(ssel_ref[0], h, preferred_element_type=f32),
                wbd4_ref[0], preferred_element_type=f32)
    for d in range(1, 4):
        y = y + jnp.dot(jnp.dot(ssel_ref[d], h, preferred_element_type=f32),
                        wbd4_ref[d], preferred_element_type=f32)
    o_ref[...] = (y + b4_ref[...]).astype(o_ref.dtype)


# --------------------------------------------------------------------------------------
# One-time host-side weight repacking (done at "init" time, outside jit).
# --------------------------------------------------------------------------------------
def pack_block_params(params, N, H, W):
    (w1, b1, wt, bt, g1, be1, w2, b2, g2, be2, w4, b4) = [
        np.asarray(p, np.float32) for p in params]
    Cin, Co = w1.shape[2], w1.shape[3]
    Ho, Wo = H // 2, W // 2
    NH = N * H

    # Row-shift selectors for the 3x3 convs (dh = 0 and dh = 2; dh = 1 is identity).
    rsel = np.zeros((2, NH, NH), np.float32)
    for k, dh in enumerate((0, 2)):
        for n in range(N):
            for h in range(H):
                hs = h + dh - 1
                if 0 <= hs < H:
                    rsel[k, n * H + h, n * H + hs] = 1.0

    # Block-banded weights for the 3x3 convs:
    #   wbd[dh][wp*Ci + c, w*Co + co] = W[dh, wp - w + 1, c, co]   (zero outside the band)
    def band_weights(w, Ci):
        out = np.zeros((3, W * Ci, W * Co), np.float32)
        for dh in range(3):
            for dw in range(3):
                for wpos in range(W):
                    wp = wpos + dw - 1
                    if 0 <= wp < W:
                        out[dh, wp * Ci:(wp + 1) * Ci, wpos * Co:(wpos + 1) * Co] = w[dh, dw]
        return out

    wbd1 = band_weights(w1, Cin)          # (3, W*Cin, W*Co)
    wbd2 = band_weights(w2, Co)           # (3, W*Co,  W*Co)

    # Stride-2 transform conv: row selectors (phase split + H padding) ...
    ssel = np.zeros((4, N * Ho, NH), np.float32)
    for dh in range(4):
        for n in range(N):
            for ho in range(Ho):
                hs = 2 * ho + dh - 1
                if 0 <= hs < H:
                    ssel[dh, n * Ho + ho, n * H + hs] = 1.0
    # ... and stride-2 block-banded width weights (+ W padding).
    wbd4 = np.zeros((4, W * Co, Wo * Co), np.float32)
    for dh in range(4):
        for dw in range(4):
            for wo in range(Wo):
                wp = 2 * wo + dw - 1
                if 0 <= wp < W:
                    wbd4[dh, wp * Co:(wp + 1) * Co, wo * Co:(wo + 1) * Co] = w4[dh, dw]

    # BN lane-averaging matrix: per-channel mean over all W lane-groups, broadcast back.
    pmat = (np.kron(np.ones((W, W), np.float32), np.eye(Co, dtype=np.float32))
            / float(N * H * W))

    def lane_tile(v, reps):
        v = np.asarray(v, np.float32).reshape(-1)
        return np.tile(v, reps).reshape(1, reps * v.shape[0])

    packed = dict(
        rsel=rsel, wbd1=wbd1, b1l=lane_tile(b1, W),
        wtl=np.tile(wt, (1, W)).astype(np.float32), btl=lane_tile(bt, W),
        g1l=lane_tile(g1, W), be1l=lane_tile(be1, W),
        wbd2=wbd2, b2l=lane_tile(b2, W), g2l=lane_tile(g2, W), be2l=lane_tile(be2, W),
        ssel=ssel, wbd4=wbd4, b4l=lane_tile(b4, Wo), pmat=pmat)
    return {k: jnp.asarray(v) for k, v in packed.items()}


def block_forward(x, t, packed):
    """Pallas version of Block.forward with up=False.  x: (N,H,W,Cin) NHWC, t: (N,Tdim)."""
    N, H, W, Cin = x.shape
    Co = packed["b1l"].shape[1] // W
    Ho, Wo = H // 2, W // 2
    x2d = x.reshape(N * H, W * Cin)                 # lane-dense activation slab

    args = (x2d, t, packed["rsel"], packed["wbd1"], packed["b1l"], packed["wtl"],
            packed["btl"], packed["g1l"], packed["be1l"], packed["wbd2"], packed["b2l"],
            packed["g2l"], packed["be2l"], packed["ssel"], packed["wbd4"], packed["b4l"],
            packed["pmat"])

    out2d = pl.pallas_call(
        fused_block_kernel,
        grid=(1,),
        in_specs=[_full_spec(a.shape) for a in args],
        out_specs=_full_spec((N * Ho, Wo * Co)),
        out_shape=jax.ShapeDtypeStruct((N * Ho, Wo * Co), jnp.float32),
        compiler_params=pltpu.CompilerParams(dimension_semantics=("arbitrary",)),
    )(*args)
    return out2d.reshape(N, Ho, Wo, Co)


def block_reference(x, t, params):
    """Pure-JAX reference (same semantics) used only as a sanity check."""
    (w1, b1, wt, bt, g1, be1, w2, b2, g2, be2, w4, b4) = params

    def conv(a, w, b, stride, pad):
        y = jax.lax.conv_general_dilated(
            a, w, (stride, stride), [(pad, pad), (pad, pad)],
            dimension_numbers=("NHWC", "HWIO", "NHWC"))
        return y + b.reshape(1, 1, 1, -1)

    def bn(h, g, beta):
        mean = jnp.mean(h, axis=(0, 1, 2), keepdims=True)
        var = jnp.mean((h - mean) ** 2, axis=(0, 1, 2), keepdims=True)
        return (h - mean) * jax.lax.rsqrt(var + EPS) * g.reshape(1, 1, 1, -1) \
            + beta.reshape(1, 1, 1, -1)

    h = bn(jnp.maximum(conv(x, w1, b1, 1, 1), 0.0), g1, be1)
    te = jnp.maximum(t @ wt + bt, 0.0)
    h = h + te[:, None, None, :]
    h = bn(jnp.maximum(conv(h, w2, b2, 1, 1), 0.0), g2, be2)
    return conv(h, w4, b4, 2, 1)


if __name__ == "__main__":
    N, H, W = 2, 16, 16
    in_ch, out_ch, time_emb_dim = 4, 8, 32

    key = jax.random.PRNGKey(0)
    ks = jax.random.split(key, 10)

    def uinit(k, shape, fan_in):
        bound = 1.0 / (fan_in ** 0.5)
        return jax.random.uniform(k, shape, jnp.float32, -bound, bound)

    # conv1: Conv2d(in_ch, out_ch, 3, padding=1)         (HWIO)
    w1 = uinit(ks[0], (3, 3, in_ch, out_ch), 9 * in_ch)
    b1 = uinit(ks[1], (1, out_ch), 9 * in_ch)
    # time_mlp: Linear(time_emb_dim, out_ch)
    wt = uinit(ks[2], (time_emb_dim, out_ch), time_emb_dim)
    bt = uinit(ks[3], (1, out_ch), time_emb_dim)
    # conv2: Conv2d(out_ch, out_ch, 3, padding=1)
    w2 = uinit(ks[4], (3, 3, out_ch, out_ch), 9 * out_ch)
    b2 = uinit(ks[5], (1, out_ch), 9 * out_ch)
    # transform (up=False): Conv2d(out_ch, out_ch, 4, 2, 1)
    w4 = uinit(ks[6], (4, 4, out_ch, out_ch), 16 * out_ch)
    b4 = uinit(ks[7], (1, out_ch), 16 * out_ch)
    # bnorm1 / bnorm2 affine params (PyTorch defaults: ones / zeros)
    g1 = jnp.ones((1, out_ch), jnp.float32)
    be1 = jnp.zeros((1, out_ch), jnp.float32)
    g2 = jnp.ones((1, out_ch), jnp.float32)
    be2 = jnp.zeros((1, out_ch), jnp.float32)
    params = (w1, b1, wt, bt, g1, be1, w2, b2, g2, be2, w4, b4)

    x = jax.random.normal(ks[8], (N, H, W, in_ch), jnp.float32)   # NHWC
    t = jax.random.normal(ks[9], (N, time_emb_dim), jnp.float32)

    packed = pack_block_params(params, N, H, W)                    # one-time weight repack
    out = jax.jit(block_forward)(x, t, packed)
    out = jax.block_until_ready(out)
    assert out.shape == (N, H // 2, W // 2, out_ch)

    ref = block_reference(x, t, params)
    err = float(jnp.max(jnp.abs(out - ref)))
    assert err < 1e-4, f"max abs err {err}"

    # TODO(synk): the up=True branch (ConvTranspose2d transform) is not implemented here.
    print("KERNEL_OK")
</pallas_src>

<mosaic_0001>
module attributes {stable_mosaic.version = 11 : i64} {
  func.func @fused_block_kernel(%arg0: i32, %arg1: memref<32x64xf32, #tpu.memory_space<vmem>>, %arg2: memref<2x32xf32, #tpu.memory_space<vmem>>, %arg3: memref<2x32x32xf32, #tpu.memory_space<vmem>>, %arg4: memref<3x64x128xf32, #tpu.memory_space<vmem>>, %arg5: memref<1x128xf32, #tpu.memory_space<vmem>>, %arg6: memref<32x128xf32, #tpu.memory_space<vmem>>, %arg7: memref<1x128xf32, #tpu.memory_space<vmem>>, %arg8: memref<1x128xf32, #tpu.memory_space<vmem>>, %arg9: memref<1x128xf32, #tpu.memory_space<vmem>>, %arg10: memref<3x128x128xf32, #tpu.memory_space<vmem>>, %arg11: memref<1x128xf32, #tpu.memory_space<vmem>>, %arg12: memref<1x128xf32, #tpu.memory_space<vmem>>, %arg13: memref<1x128xf32, #tpu.memory_space<vmem>>, %arg14: memref<4x16x32xf32, #tpu.memory_space<vmem>>, %arg15: memref<4x128x64xf32, #tpu.memory_space<vmem>>, %arg16: memref<1x64xf32, #tpu.memory_space<vmem>>, %arg17: memref<128x128xf32, #tpu.memory_space<vmem>>, %arg18: memref<16x64xf32, #tpu.memory_space<vmem>>) attributes {dimension_semantics = [#tpu.dimension_semantics<arbitrary>], iteration_bounds = array<i64: 1>, scalar_prefetch = 0 : i64, scratch_operands = 0 : i64, tpu.core_type = #tpu.core_type<tc>, window_params = [{pipeline_mode = #tpu.pipeline_mode<synchronous>, transform_indices = @transform_0, window_bounds = array<i64: 32, 64>}, {pipeline_mode = #tpu.pipeline_mode<synchronous>, transform_indices = @transform_1, window_bounds = array<i64: 2, 32>}, {pipeline_mode = #tpu.pipeline_mode<synchronous>, transform_indices = @transform_2, window_bounds = array<i64: 2, 32, 32>}, {pipeline_mode = #tpu.pipeline_mode<synchronous>, transform_indices = @transform_3, window_bounds = array<i64: 3, 64, 128>}, {pipeline_mode = #tpu.pipeline_mode<synchronous>, transform_indices = @transform_4, window_bounds = array<i64: 1, 128>}, {pipeline_mode = #tpu.pipeline_mode<synchronous>, transform_indices = @transform_5, window_bounds = array<i64: 32, 128>}, {pipeline_mode = #tpu.pipeline_mode<synchronous>, transform_indices = @transform_6, window_bounds = array<i64: 1, 128>}, {pipeline_mode = #tpu.pipeline_mode<synchronous>, transform_indices = @transform_7, window_bounds = array<i64: 1, 128>}, {pipeline_mode = #tpu.pipeline_mode<synchronous>, transform_indices = @transform_8, window_bounds = array<i64: 1, 128>}, {pipeline_mode = #tpu.pipeline_mode<synchronous>, transform_indices = @transform_9, window_bounds = array<i64: 3, 128, 128>}, {pipeline_mode = #tpu.pipeline_mode<synchronous>, transform_indices = @transform_10, window_bounds = array<i64: 1, 128>}, {pipeline_mode = #tpu.pipeline_mode<synchronous>, transform_indices = @transform_11, window_bounds = array<i64: 1, 128>}, {pipeline_mode = #tpu.pipeline_mode<synchronous>, transform_indices = @transform_12, window_bounds = array<i64: 1, 128>}, {pipeline_mode = #tpu.pipeline_mode<synchronous>, transform_indices = @transform_13, window_bounds = array<i64: 4, 16, 32>}, {pipeline_mode = #tpu.pipeline_mode<synchronous>, transform_indices = @transform_14, window_bounds = array<i64: 4, 128, 64>}, {pipeline_mode = #tpu.pipeline_mode<synchronous>, transform_indices = @transform_15, window_bounds = array<i64: 1, 64>}, {pipeline_mode = #tpu.pipeline_mode<synchronous>, transform_indices = @transform_16, window_bounds = array<i64: 128, 128>}, {pipeline_mode = #tpu.pipeline_mode<synchronous>, transform_indices = @transform_17, window_bounds = array<i64: 16, 64>}]} {
    %c0 = arith.constant 0 : index
    %c0_0 = arith.constant 0 : index
    %0 = vector.load %arg1[%c0, %c0_0] : memref<32x64xf32, #tpu.memory_space<vmem>>, vector<32x64xf32>
    %c1 = arith.constant 1 : index
    %c0_1 = arith.constant 0 : index
    %c0_2 = arith.constant 0 : index
    %1 = vector.load %arg4[%c1, %c0_1, %c0_2] : memref<3x64x128xf32, #tpu.memory_space<vmem>>, vector<1x64x128xf32>
    %2 = vector.shape_cast %1 : vector<1x64x128xf32> to vector<64x128xf32>
    %cst = arith.constant dense<0.000000e+00> : vector<32x128xf32>
    %3 = tpu.matmul %0, %2, %cst {dimension_numbers = #tpu.dot_dimension_numbers<[1], [0], [0], [1], [0, 0, 1, 1], [], []>} : vector<32x64xf32>, vector<64x128xf32>, vector<32x128xf32> -> vector<32x128xf32>
    %c0_3 = arith.constant 0 : index
    %c0_4 = arith.constant 0 : index
    %c0_5 = arith.constant 0 : index
    %4 = vector.load %arg3[%c0_3, %c0_4, %c0_5] : memref<2x32x32xf32, #tpu.memory_space<vmem>>, vector<1x32x32xf32>
    %5 = vector.shape_cast %4 : vector<1x32x32xf32> to vector<32x32xf32>
    %cst_6 = arith.constant dense<0.000000e+00> : vector<32x64xf32>
    %6 = tpu.matmul %5, %0, %cst_6 {dimension_numbers = #tpu.dot_dimension_numbers<[1], [0], [0], [1], [0, 0, 1, 1], [], []>} : vector<32x32xf32>, vector<32x64xf32>, vector<32x64xf32> -> vector<32x64xf32>
    %c0_7 = arith.constant 0 : index
    %c0_8 = arith.constant 0 : index
    %c0_9 = arith.constant 0 : index
    %7 = vector.load %arg4[%c0_7, %c0_8, %c0_9] : memref<3x64x128xf32, #tpu.memory_space<vmem>>, vector<1x64x128xf32>
    %8 = vector.shape_cast %7 : vector<1x64x128xf32> to vector<64x128xf32>
    %cst_10 = arith.constant dense<0.000000e+00> : vector<32x128xf32>
    %9 = tpu.matmul %6, %8, %cst_10 {dimension_numbers = #tpu.dot_dimension_numbers<[1], [0], [0], [1], [0, 0, 1, 1], [], []>} : vector<32x64xf32>, vector<64x128xf32>, vector<32x128xf32> -> vector<32x128xf32>
    %10 = arith.addf %3, %9 : vector<32x128xf32>
    %c1_11 = arith.constant 1 : index
    %c0_12 = arith.constant 0 : index
    %c0_13 = arith.constant 0 : index
    %11 = vector.load %arg3[%c1_11, %c0_12, %c0_13] : memref<2x32x32xf32, #tpu.memory_space<vmem>>, vector<1x32x32xf32>
    %12 = vector.shape_cast %11 : vector<1x32x32xf32> to vector<32x32xf32>
    %cst_14 = arith.constant dense<0.000000e+00> : vector<32x64xf32>
    %13 = tpu.matmul %12, %0, %cst_14 {dimension_numbers = #tpu.dot_dimension_numbers<[1], [0], [0], [1], [0, 0, 1, 1], [], []>} : vector<32x32xf32>, vector<32x64xf32>, vector<32x64xf32> -> vector<32x64xf32>
    %c2 = arith.constant 2 : index
    %c0_15 = arith.constant 0 : index
    %c0_16 = arith.constant 0 : index
    %14 = vector.load %arg4[%c2, %c0_15, %c0_16] : memref<3x64x128xf32, #tpu.memory_space<vmem>>, vector<1x64x128xf32>
    %15 = vector.shape_cast %14 : vector<1x64x128xf32> to vector<64x128xf32>
    %cst_17 = arith.constant dense<0.000000e+00> : vector<32x128xf32>
    %16 = tpu.matmul %13, %15, %cst_17 {dimension_numbers = #tpu.dot_dimension_numbers<[1], [0], [0], [1], [0, 0, 1, 1], [], []>} : vector<32x64xf32>, vector<64x128xf32>, vector<32x128xf32> -> vector<32x128xf32>
    %17 = arith.addf %10, %16 : vector<32x128xf32>
    %c0_18 = arith.constant 0 : index
    %c0_19 = arith.constant 0 : index
    %18 = vector.load %arg5[%c0_18, %c0_19] : memref<1x128xf32, #tpu.memory_space<vmem>>, vector<1x128xf32>
    %19 = vector.broadcast %18 : vector<1x128xf32> to vector<32x128xf32>
    %20 = arith.addf %17, %19 : vector<32x128xf32>
    %cst_20 = arith.constant 0.000000e+00 : f32
    %21 = vector.broadcast %cst_20 : f32 to vector<32x128xf32>
    %22 = arith.maximumf %20, %21 : vector<32x128xf32>
    %cst_21 = arith.constant dense<0.000000e+00> : vector<128xf32>
    %23 = vector.multi_reduction <add>, %22, %cst_21 [0] : vector<32x128xf32> to vector<128xf32>
    %24 = vector.shape_cast %23 : vector<128xf32> to vector<1x128xf32>
    %25 = arith.mulf %22, %22 : vector<32x128xf32>
    %cst_22 = arith.constant dense<0.000000e+00> : vector<128xf32>
    %26 = vector.multi_reduction <add>, %25, %cst_22 [0] : vector<32x128xf32> to vector<128xf32>
    %27 = vector.shape_cast %26 : vector<128xf32> to vector<1x128xf32>
    %c0_23 = arith.constant 0 : index
    %c0_24 = arith.constant 0 : index
    %28 = vector.load %arg17[%c0_23, %c0_24] : memref<128x128xf32, #tpu.memory_space<vmem>>, vector<128x128xf32>
    %cst_25 = arith.constant dense<0.000000e+00> : vector<1x128xf32>
    %29 = tpu.matmul %24, %28, %cst_25 {dimension_numbers = #tpu.dot_dimension_numbers<[1], [0], [0], [1], [0, 0, 1, 1], [], []>} : vector<1x128xf32>, vector<128x128xf32>, vector<1x128xf32> -> vector<1x128xf32>
    %c0_26 = arith.constant 0 : index
    %c0_27 = arith.constant 0 : index
    %30 = vector.load %arg17[%c0_26, %c0_27] : memref<128x128xf32, #tpu.memory_space<vmem>>, vector<128x128xf32>
    %cst_28 = arith.constant dense<0.000000e+00> : vector<1x128xf32>
    %31 = tpu.matmul %27, %30, %cst_28 {dimension_numbers = #tpu.dot_dimension_numbers<[1], [0], [0], [1], [0, 0, 1, 1], [], []>} : vector<1x128xf32>, vector<128x128xf32>, vector<1x128xf32> -> vector<1x128xf32>
    %32 = arith.mulf %29, %29 : vector<1x128xf32>
    %33 = arith.subf %31, %32 : vector<1x128xf32>
    %34 = vector.broadcast %29 : vector<1x128xf32> to vector<32x128xf32>
    %35 = arith.subf %22, %34 : vector<32x128xf32>
    %cst_29 = arith.constant 9.99999974E-6 : f32
    %36 = vector.broadcast %cst_29 : f32 to vector<1x128xf32>
    %37 = arith.addf %33, %36 : vector<1x128xf32>
    %38 = math.rsqrt %37 : vector<1x128xf32>
    %39 = vector.broadcast %38 : vector<1x128xf32> to vector<32x128xf32>
    %40 = arith.mulf %35, %39 : vector<32x128xf32>
    %c0_30 = arith.constant 0 : index
    %c0_31 = arith.constant 0 : index
    %41 = vector.load %arg8[%c0_30, %c0_31] : memref<1x128xf32, #tpu.memory_space<vmem>>, vector<1x128xf32>
    %42 = vector.broadcast %41 : vector<1x128xf32> to vector<32x128xf32>
    %43 = arith.mulf %40, %42 : vector<32x128xf32>
    %c0_32 = arith.constant 0 : index
    %c0_33 = arith.constant 0 : index
    %44 = vector.load %arg9[%c0_32, %c0_33] : memref<1x128xf32, #tpu.memory_space<vmem>>, vector<1x128xf32>
    %45 = vector.broadcast %44 : vector<1x128xf32> to vector<32x128xf32>
    %46 = arith.addf %43, %45 : vector<32x128xf32>
    %c0_34 = arith.constant 0 : index
    %c0_35 = arith.constant 0 : index
    %47 = vector.load %arg2[%c0_34, %c0_35] : memref<2x32xf32, #tpu.memory_space<vmem>>, vector<2x32xf32>
    %c0_36 = arith.constant 0 : index
    %c0_37 = arith.constant 0 : index
    %48 = vector.load %arg6[%c0_36, %c0_37] : memref<32x128xf32, #tpu.memory_space<vmem>>, vector<32x128xf32>
    %cst_38 = arith.constant dense<0.000000e+00> : vector<2x128xf32>
    %49 = tpu.matmul %47, %48, %cst_38 {dimension_numbers = #tpu.dot_dimension_numbers<[1], [0], [0], [1], [0, 0, 1, 1], [], []>} : vector<2x32xf32>, vector<32x128xf32>, vector<2x128xf32> -> vector<2x128xf32>
    %c0_39 = arith.constant 0 : index
    %c0_40 = arith.constant 0 : index
    %50 = vector.load %arg7[%c0_39, %c0_40] : memref<1x128xf32, #tpu.memory_space<vmem>>, vector<1x128xf32>
    %51 = vector.broadcast %50 : vector<1x128xf32> to vector<2x128xf32>
    %52 = arith.addf %49, %51 : vector<2x128xf32>
    %cst_41 = arith.constant 0.000000e+00 : f32
    %53 = vector.broadcast %cst_41 : f32 to vector<2x128xf32>
    %54 = arith.maximumf %52, %53 : vector<2x128xf32>
    %55 = vector.shape_cast %46 : vector<32x128xf32> to vector<2x16x128xf32>
    %56 = vector.shape_cast %54 : vector<2x128xf32> to vector<2x1x128xf32>
    %57 = vector.broadcast %56 : vector<2x1x128xf32> to vector<2x16x128xf32>
    %58 = arith.addf %55, %57 : vector<2x16x128xf32>
    %59 = vector.shape_cast %58 : vector<2x16x128xf32> to vector<32x128xf32>
    %c1_42 = arith.constant 1 : index
    %c0_43 = arith.constant 0 : index
    %c0_44 = arith.constant 0 : index
    %60 = vector.load %arg10[%c1_42, %c0_43, %c0_44] : memref<3x128x128xf32, #tpu.memory_space<vmem>>, vector<1x128x128xf32>
    %61 = vector.shape_cast %60 : vector<1x128x128xf32> to vector<128x128xf32>
    %cst_45 = arith.constant dense<0.000000e+00> : vector<32x128xf32>
    %62 = tpu.matmul %59, %61, %cst_45 {dimension_numbers = #tpu.dot_dimension_numbers<[1], [0], [0], [1], [0, 0, 1, 1], [], []>} : vector<32x128xf32>, vector<128x128xf32>, vector<32x128xf32> -> vector<32x128xf32>
    %c0_46 = arith.constant 0 : index
    %c0_47 = arith.constant 0 : index
    %c0_48 = arith.constant 0 : index
    %63 = vector.load %arg3[%c0_46, %c0_47, %c0_48] : memref<2x32x32xf32, #tpu.memory_space<vmem>>, vector<1x32x32xf32>
    %64 = vector.shape_cast %63 : vector<1x32x32xf32> to vector<32x32xf32>
    %cst_49 = arith.constant dense<0.000000e+00> : vector<32x128xf32>
    %65 = tpu.matmul %64, %59, %cst_49 {dimension_numbers = #tpu.dot_dimension_numbers<[1], [0], [0], [1], [0, 0, 1, 1], [], []>} : vector<32x32xf32>, vector<32x128xf32>, vector<32x128xf32> -> vector<32x128xf32>
    %c0_50 = arith.constant 0 : index
    %c0_51 = arith.constant 0 : index
    %c0_52 = arith.constant 0 : index
    %66 = vector.load %arg10[%c0_50, %c0_51, %c0_52] : memref<3x128x128xf32, #tpu.memory_space<vmem>>, vector<1x128x128xf32>
    %67 = vector.shape_cast %66 : vector<1x128x128xf32> to vector<128x128xf32>
    %cst_53 = arith.constant dense<0.000000e+00> : vector<32x128xf32>
    %68 = tpu.matmul %65, %67, %cst_53 {dimension_numbers = #tpu.dot_dimension_numbers<[1], [0], [0], [1], [0, 0, 1, 1], [], []>} : vector<32x128xf32>, vector<128x128xf32>, vector<32x128xf32> -> vector<32x128xf32>
    %69 = arith.addf %62, %68 : vector<32x128xf32>
    %c1_54 = arith.constant 1 : index
    %c0_55 = arith.constant 0 : index
    %c0_56 = arith.constant 0 : index
    %70 = vector.load %arg3[%c1_54, %c0_55, %c0_56] : memref<2x32x32xf32, #tpu.memory_space<vmem>>, vector<1x32x32xf32>
    %71 = vector.shape_cast %70 : vector<1x32x32xf32> to vector<32x32xf32>
    %cst_57 = arith.constant dense<0.000000e+00> : vector<32x128xf32>
    %72 = tpu.matmul %71, %59, %cst_57 {dimension_numbers = #tpu.dot_dimension_numbers<[1], [0], [0], [1], [0, 0, 1, 1], [], []>} : vector<32x32xf32>, vector<32x128xf32>, vector<32x128xf32> -> vector<32x128xf32>
    %c2_58 = arith.constant 2 : index
    %c0_59 = arith.constant 0 : index
    %c0_60 = arith.constant 0 : index
    %73 = vector.load %arg10[%c2_58, %c0_59, %c0_60] : memref<3x128x128xf32, #tpu.memory_space<vmem>>, vector<1x128x128xf32>
    %74 = vector.shape_cast %73 : vector<1x128x128xf32> to vector<128x128xf32>
    %cst_61 = arith.constant dense<0.000000e+00> : vector<32x128xf32>
    %75 = tpu.matmul %72, %74, %cst_61 {dimension_numbers = #tpu.dot_dimension_numbers<[1], [0], [0], [1], [0, 0, 1, 1], [], []>} : vector<32x128xf32>, vector<128x128xf32>, vector<32x128xf32> -> vector<32x128xf32>
    %76 = arith.addf %69, %75 : vector<32x128xf32>
    %c0_62 = arith.constant 0 : index
    %c0_63 = arith.constant 0 : index
    %77 = vector.load %arg11[%c0_62, %c0_63] : memref<1x128xf32, #tpu.memory_space<vmem>>, vector<1x128xf32>
    %78 = vector.broadcast %77 : vector<1x128xf32> to vector<32x128xf32>
    %79 = arith.addf %76, %78 : vector<32x128xf32>
    %cst_64 = arith.constant 0.000000e+00 : f32
    %80 = vector.broadcast %cst_64 : f32 to vector<32x128xf32>
    %81 = arith.maximumf %79, %80 : vector<32x128xf32>
    %cst_65 = arith.constant dense<0.000000e+00> : vector<128xf32>
    %82 = vector.multi_reduction <add>, %81, %cst_65 [0] : vector<32x128xf32> to vector<128xf32>
    %83 = vector.shape_cast %82 : vector<128xf32> to vector<1x128xf32>
    %84 = arith.mulf %81, %81 : vector<32x128xf32>
    %cst_66 = arith.constant dense<0.000000e+00> : vector<128xf32>
    %85 = vector.multi_reduction <add>, %84, %cst_66 [0] : vector<32x128xf32> to vector<128xf32>
    %86 = vector.shape_cast %85 : vector<128xf32> to vector<1x128xf32>
    %c0_67 = arith.constant 0 : index
    %c0_68 = arith.constant 0 : index
    %87 = vector.load %arg17[%c0_67, %c0_68] : memref<128x128xf32, #tpu.memory_space<vmem>>, vector<128x128xf32>
    %cst_69 = arith.constant dense<0.000000e+00> : vector<1x128xf32>
    %88 = tpu.matmul %83, %87, %cst_69 {dimension_numbers = #tpu.dot_dimension_numbers<[1], [0], [0], [1], [0, 0, 1, 1], [], []>} : vector<1x128xf32>, vector<128x128xf32>, vector<1x128xf32> -> vector<1x128xf32>
    %c0_70 = arith.constant 0 : index
    %c0_71 = arith.constant 0 : index
    %89 = vector.load %arg17[%c0_70, %c0_71] : memref<128x128xf32, #tpu.memory_space<vmem>>, vector<128x128xf32>
    %cst_72 = arith.constant dense<0.000000e+00> : vector<1x128xf32>
    %90 = tpu.matmul %86, %89, %cst_72 {dimension_numbers = #tpu.dot_dimension_numbers<[1], [0], [0], [1], [0, 0, 1, 1], [], []>} : vector<1x128xf32>, vector<128x128xf32>, vector<1x128xf32> -> vector<1x128xf32>
    %91 = arith.mulf %88, %88 : vector<1x128xf32>
    %92 = arith.subf %90, %91 : vector<1x128xf32>
    %93 = vector.broadcast %88 : vector<1x128xf32> to vector<32x128xf32>
    %94 = arith.subf %81, %93 : vector<32x128xf32>
    %cst_73 = arith.constant 9.99999974E-6 : f32
    %95 = vector.broadcast %cst_73 : f32 to vector<1x128xf32>
    %96 = arith.addf %92, %95 : vector<1x128xf32>
    %97 = math.rsqrt %96 : vector<1x128xf32>
    %98 = vector.broadcast %97 : vector<1x128xf32> to vector<32x128xf32>
    %99 = arith.mulf %94, %98 : vector<32x128xf32>
    %c0_74 = arith.constant 0 : index
    %c0_75 = arith.constant 0 : index
    %100 = vector.load %arg12[%c0_74, %c0_75] : memref<1x128xf32, #tpu.memory_space<vmem>>, vector<1x128xf32>
    %101 = vector.broadcast %100 : vector<1x128xf32> to vector<32x128xf32>
    %102 = arith.mulf %99, %101 : vector<32x128xf32>
    %c0_76 = arith.constant 0 : index
    %c0_77 = arith.constant 0 : index
    %103 = vector.load %arg13[%c0_76, %c0_77] : memref<1x128xf32, #tpu.memory_space<vmem>>, vector<1x128xf32>
    %104 = vector.broadcast %103 : vector<1x128xf32> to vector<32x128xf32>
    %105 = arith.addf %102, %104 : vector<32x128xf32>
    %c0_78 = arith.constant 0 : index
    %c0_79 = arith.constant 0 : index
    %c0_80 = arith.constant 0 : index
    %106 = vector.load %arg14[%c0_78, %c0_79, %c0_80] : memref<4x16x32xf32, #tpu.memory_space<vmem>>, vector<1x16x32xf32>
    %107 = vector.shape_cast %106 : vector<1x16x32xf32> to vector<16x32xf32>
    %cst_81 = arith.constant dense<0.000000e+00> : vector<16x128xf32>
    %108 = tpu.matmul %107, %105, %cst_81 {dimension_numbers = #tpu.dot_dimension_numbers<[1], [0], [0], [1], [0, 0, 1, 1], [], []>} : vector<16x32xf32>, vector<32x128xf32>, vector<16x128xf32> -> vector<16x128xf32>
    %c0_82 = arith.constant 0 : index
    %c0_83 = arith.constant 0 : index
    %c0_84 = arith.constant 0 : index
    %109 = vector.load %arg15[%c0_82, %c0_83, %c0_84] : memref<4x128x64xf32, #tpu.memory_space<vmem>>, vector<1x128x64xf32>
    %110 = vector.shape_cast %109 : vector<1x128x64xf32> to vector<128x64xf32>
    %cst_85 = arith.constant dense<0.000000e+00> : vector<16x64xf32>
    %111 = tpu.matmul %108, %110, %cst_85 {dimension_numbers = #tpu.dot_dimension_numbers<[1], [0], [0], [1], [0, 0, 1, 1], [], []>} : vector<16x128xf32>, vector<128x64xf32>, vector<16x64xf32> -> vector<16x64xf32>
    %c1_86 = arith.constant 1 : index
    %c0_87 = arith.constant 0 : index
    %c0_88 = arith.constant 0 : index
    %112 = vector.load %arg14[%c1_86, %c0_87, %c0_88] : memref<4x16x32xf32, #tpu.memory_space<vmem>>, vector<1x16x32xf32>
    %113 = vector.shape_cast %112 : vector<1x16x32xf32> to vector<16x32xf32>
    %cst_89 = arith.constant dense<0.000000e+00> : vector<16x128xf32>
    %114 = tpu.matmul %113, %105, %cst_89 {dimension_numbers = #tpu.dot_dimension_numbers<[1], [0], [0], [1], [0, 0, 1, 1], [], []>} : vector<16x32xf32>, vector<32x128xf32>, vector<16x128xf32> -> vector<16x128xf32>
    %c1_90 = arith.constant 1 : index
    %c0_91 = arith.constant 0 : index
    %c0_92 = arith.constant 0 : index
    %115 = vector.load %arg15[%c1_90, %c0_91, %c0_92] : memref<4x128x64xf32, #tpu.memory_space<vmem>>, vector<1x128x64xf32>
    %116 = vector.shape_cast %115 : vector<1x128x64xf32> to vector<128x64xf32>
    %cst_93 = arith.constant dense<0.000000e+00> : vector<16x64xf32>
    %117 = tpu.matmul %114, %116, %cst_93 {dimension_numbers = #tpu.dot_dimension_numbers<[1], [0], [0], [1], [0, 0, 1, 1], [], []>} : vector<16x128xf32>, vector<128x64xf32>, vector<16x64xf32> -> vector<16x64xf32>
    %118 = arith.addf %111, %117 : vector<16x64xf32>
    %c2_94 = arith.constant 2 : index
    %c0_95 = arith.constant 0 : index
    %c0_96 = arith.constant 0 : index
    %119 = vector.load %arg14[%c2_94, %c0_95, %c0_96] : memref<4x16x32xf32, #tpu.memory_space<vmem>>, vector<1x16x32xf32>
    %120 = vector.shape_cast %119 : vector<1x16x32xf32> to vector<16x32xf32>
    %cst_97 = arith.constant dense<0.000000e+00> : vector<16x128xf32>
    %121 = tpu.matmul %120, %105, %cst_97 {dimension_numbers = #tpu.dot_dimension_numbers<[1], [0], [0], [1], [0, 0, 1, 1], [], []>} : vector<16x32xf32>, vector<32x128xf32>, vector<16x128xf32> -> vector<16x128xf32>
    %c2_98 = arith.constant 2 : index
    %c0_99 = arith.constant 0 : index
    %c0_100 = arith.constant 0 : index
    %122 = vector.load %arg15[%c2_98, %c0_99, %c0_100] : memref<4x128x64xf32, #tpu.memory_space<vmem>>, vector<1x128x64xf32>
    %123 = vector.shape_cast %122 : vector<1x128x64xf32> to vector<128x64xf32>
    %cst_101 = arith.constant dense<0.000000e+00> : vector<16x64xf32>
    %124 = tpu.matmul %121, %123, %cst_101 {dimension_numbers = #tpu.dot_dimension_numbers<[1], [0], [0], [1], [0, 0, 1, 1], [], []>} : vector<16x128xf32>, vector<128x64xf32>, vector<16x64xf32> -> vector<16x64xf32>
    %125 = arith.addf %118, %124 : vector<16x64xf32>
    %c3 = arith.constant 3 : index
    %c0_102 = arith.constant 0 : index
    %c0_103 = arith.constant 0 : index
    %126 = vector.load %arg14[%c3, %c0_102, %c0_103] : memref<4x16x32xf32, #tpu.memory_space<vmem>>, vector<1x16x32xf32>
    %127 = vector.shape_cast %126 : vector<1x16x32xf32> to vector<16x32xf32>
    %cst_104 = arith.constant dense<0.000000e+00> : vector<16x128xf32>
    %128 = tpu.matmul %127, %105, %cst_104 {dimension_numbers = #tpu.dot_dimension_numbers<[1], [0], [0], [1], [0, 0, 1, 1], [], []>} : vector<16x32xf32>, vector<32x128xf32>, vector<16x128xf32> -> vector<16x128xf32>
    %c3_105 = arith.constant 3 : index
    %c0_106 = arith.constant 0 : index
    %c0_107 = arith.constant 0 : index
    %129 = vector.load %arg15[%c3_105, %c0_106, %c0_107] : memref<4x128x64xf32, #tpu.memory_space<vmem>>, vector<1x128x64xf32>
    %130 = vector.shape_cast %129 : vector<1x128x64xf32> to vector<128x64xf32>
    %cst_108 = arith.constant dense<0.000000e+00> : vector<16x64xf32>
    %131 = tpu.matmul %128, %130, %cst_108 {dimension_numbers = #tpu.dot_dimension_numbers<[1], [0], [0], [1], [0, 0, 1, 1], [], []>} : vector<16x128xf32>, vector<128x64xf32>, vector<16x64xf32> -> vector<16x64xf32>
    %132 = arith.addf %125, %131 : vector<16x64xf32>
    %c0_109 = arith.constant 0 : index
    %c0_110 = arith.constant 0 : index
    %133 = vector.load %arg16[%c0_109, %c0_110] : memref<1x64xf32, #tpu.memory_space<vmem>>, vector<1x64xf32>
    %134 = vector.broadcast %133 : vector<1x64xf32> to vector<16x64xf32>
    %135 = arith.addf %132, %134 : vector<16x64xf32>
    %c0_111 = arith.constant 0 : index
    %c0_112 = arith.constant 0 : index
    %136 = vector.load %arg18[%c0_111, %c0_112] : memref<16x64xf32, #tpu.memory_space<vmem>>, vector<16x64xf32>
    tpu.vector_store %arg18[%c0_111, %c0_112], %135 {strides = array<i32>} : memref<16x64xf32, #tpu.memory_space<vmem>>, vector<16x64xf32>,
    return
  }
  func.func @transform_0(%arg0: i32) -> (i32, i32) {
    %c0_i32 = arith.constant 0 : i32
    %c0_i32_0 = arith.constant 0 : i32
    %c0_i32_1 = arith.constant 0 : i32
    return %c0_i32, %c0_i32_0 : i32, i32
  }
  func.func @transform_1(%arg0: i32) -> (i32, i32) {
    %c0_i32 = arith.constant 0 : i32
    %c0_i32_0 = arith.constant 0 : i32
    %c0_i32_1 = arith.constant 0 : i32
    return %c0_i32, %c0_i32_0 : i32, i32
  }
  func.func @transform_2(%arg0: i32) -> (i32, i32, i32) {
    %c0_i32 = arith.constant 0 : i32
    %c0_i32_0 = arith.constant 0 : i32
    %c0_i32_1 = arith.constant 0 : i32
    %c0_i32_2 = arith.constant 0 : i32
    return %c0_i32, %c0_i32_0, %c0_i32_1 : i32, i32, i32
  }
  func.func @transform_3(%arg0: i32) -> (i32, i32, i32) {
    %c0_i32 = arith.constant 0 : i32
    %c0_i32_0 = arith.constant 0 : i32
    %c0_i32_1 = arith.constant 0 : i32
    %c0_i32_2 = arith.constant 0 : i32
    return %c0_i32, %c0_i32_0, %c0_i32_1 : i32, i32, i32
  }
  func.func @transform_4(%arg0: i32) -> (i32, i32) {
    %c0_i32 = arith.constant 0 : i32
    %c0_i32_0 = arith.constant 0 : i32
    %c0_i32_1 = arith.constant 0 : i32
    return %c0_i32, %c0_i32_0 : i32, i32
  }
  func.func @transform_5(%arg0: i32) -> (i32, i32) {
    %c0_i32 = arith.constant 0 : i32
    %c0_i32_0 = arith.constant 0 : i32
    %c0_i32_1 = arith.constant 0 : i32
    return %c0_i32, %c0_i32_0 : i32, i32
  }
  func.func @transform_6(%arg0: i32) -> (i32, i32) {
    %c0_i32 = arith.constant 0 : i32
    %c0_i32_0 = arith.constant 0 : i32
    %c0_i32_1 = arith.constant 0 : i32
    return %c0_i32, %c0_i32_0 : i32, i32
  }
  func.func @transform_7(%arg0: i32) -> (i32, i32) {
    %c0_i32 = arith.constant 0 : i32
    %c0_i32_0 = arith.constant 0 : i32
    %c0_i32_1 = arith.constant 0 : i32
    return %c0_i32, %c0_i32_0 : i32, i32
  }
  func.func @transform_8(%arg0: i32) -> (i32, i32) {
    %c0_i32 = arith.constant 0 : i32
    %c0_i32_0 = arith.constant 0 : i32
    %c0_i32_1 = arith.constant 0 : i32
    return %c0_i32, %c0_i32_0 : i32, i32
  }
  func.func @transform_9(%arg0: i32) -> (i32, i32, i32) {
    %c0_i32 = arith.constant 0 : i32
    %c0_i32_0 = arith.constant 0 : i32
    %c0_i32_1 = arith.constant 0 : i32
    %c0_i32_2 = arith.constant 0 : i32
    return %c0_i32, %c0_i32_0, %c0_i32_1 : i32, i32, i32
  }
  func.func @transform_10(%arg0: i32) -> (i32, i32) {
    %c0_i32 = arith.constant 0 : i32
    %c0_i32_0 = arith.constant 0 : i32
    %c0_i32_1 = arith.constant 0 : i32
    return %c0_i32, %c0_i32_0 : i32, i32
  }
  func.func @transform_11(%arg0: i32) -> (i32, i32) {
    %c0_i32 = arith.constant 0 : i32
    %c0_i32_0 = arith.constant 0 : i32
    %c0_i32_1 = arith.constant 0 : i32
    return %c0_i32, %c0_i32_0 : i32, i32
  }
  func.func @transform_12(%arg0: i32) -> (i32, i32) {
    %c0_i32 = arith.constant 0 : i32
    %c0_i32_0 = arith.constant 0 : i32
    %c0_i32_1 = arith.constant 0 : i32
    return %c0_i32, %c0_i32_0 : i32, i32
  }
  func.func @transform_13(%arg0: i32) -> (i32, i32, i32) {
    %c0_i32 = arith.constant 0 : i32
    %c0_i32_0 = arith.constant 0 : i32
    %c0_i32_1 = arith.constant 0 : i32
    %c0_i32_2 = arith.constant 0 : i32
    return %c0_i32, %c0_i32_0, %c0_i32_1 : i32, i32, i32
  }
  func.func @transform_14(%arg0: i32) -> (i32, i32, i32) {
    %c0_i32 = arith.constant 0 : i32
    %c0_i32_0 = arith.constant 0 : i32
    %c0_i32_1 = arith.constant 0 : i32
    %c0_i32_2 = arith.constant 0 : i32
    return %c0_i32, %c0_i32_0, %c0_i32_1 : i32, i32, i32
  }
  func.func @transform_15(%arg0: i32) -> (i32, i32) {
    %c0_i32 = arith.constant 0 : i32
    %c0_i32_0 = arith.constant 0 : i32
    %c0_i32_1 = arith.constant 0 : i32
    return %c0_i32, %c0_i32_0 : i32, i32
  }
  func.func @transform_16(%arg0: i32) -> (i32, i32) {
    %c0_i32 = arith.constant 0 : i32
    %c0_i32_0 = arith.constant 0 : i32
    %c0_i32_1 = arith.constant 0 : i32
    return %c0_i32, %c0_i32_0 : i32, i32
  }
  func.func @transform_17(%arg0: i32) -> (i32, i32) {
    %c0_i32 = arith.constant 0 : i32
    %c0_i32_0 = arith.constant 0 : i32
    %c0_i32_1 = arith.constant 0 : i32
    return %c0_i32, %c0_i32_0 : i32, i32
  }
}

</mosaic_0001>

<llo_original>
// kernel: block_forward.1
$region0: #{block_forward.1}
  #allocation0 [shape = 'u32[]', space=smem, size = 0x4, offset = 0x4, fixed_abs, tag = 'smem constant byte address 0x4 - core index']
  #allocation1 [shape = 'u32[144,128]{1,0:T(1,128)}', space=vmem, size = 0x12000, scoped, tag = 'internal scratch']
  %s0 = inlined_call_operand.vmem [shape: f32[32,64], index: 0, kind: input, shape index: {}]
  %s1 = inlined_call_operand.vmem [shape: f32[2,32], index: 1, kind: input, shape index: {}]
  %s2 = inlined_call_operand.vmem [shape: f32[2,32,32], index: 2, kind: input, shape index: {}]
  %s3 = inlined_call_operand.vmem [shape: f32[3,64,128], index: 3, kind: input, shape index: {}]
  %s4 = inlined_call_operand.vmem [shape: f32[1,128], index: 4, kind: input, shape index: {}]
  %s5 = inlined_call_operand.vmem [shape: f32[32,128], index: 5, kind: input, shape index: {}]
  %s6 = inlined_call_operand.vmem [shape: f32[1,128], index: 6, kind: input, shape index: {}]
  %s7 = inlined_call_operand.vmem [shape: f32[1,128], index: 7, kind: input, shape index: {}]
  %s8 = inlined_call_operand.vmem [shape: f32[1,128], index: 8, kind: input, shape index: {}]
  %s9 = inlined_call_operand.vmem [shape: f32[3,128,128], index: 9, kind: input, shape index: {}]
  %s10 = inlined_call_operand.vmem [shape: f32[1,128], index: 10, kind: input, shape index: {}]
  %s11 = inlined_call_operand.vmem [shape: f32[1,128], index: 11, kind: input, shape index: {}]
  %s12 = inlined_call_operand.vmem [shape: f32[1,128], index: 12, kind: input, shape index: {}]
  %s13 = inlined_call_operand.vmem [shape: f32[4,16,32], index: 13, kind: input, shape index: {}]
  %s14 = inlined_call_operand.vmem [shape: f32[4,128,64], index: 14, kind: input, shape index: {}]
  %s15 = inlined_call_operand.vmem [shape: f32[1,64], index: 15, kind: input, shape index: {}]
  %s16 = inlined_call_operand.vmem [shape: f32[128,128], index: 16, kind: input, shape index: {}]
  %s17 = inlined_call_operand.vmem [shape: f32[16,64], index: 17, kind: output, shape index: {}]
  %s18 = sld [smem:[#allocation0]]
  $region78: #{block_forward.1} parent=0
    _
  %s20 = ssub.s32 1, %s18
  %s21 = scalar_select 0, %s20, %s18
  // Predicated region
  $region2: #{block_forward.1} parent=0 // pred_check
    _
  $region3: #{block_forward.1} parent=0 // pred_check_branch
    %23 = sbr.rel (0) target = $region5
  $region4: #{block_forward.1} parent=0 // pred_region
    _
  $region5: #{block_forward.1} parent=0 // pred_fallthru
    _
  // Predicated region
  $region6: #{block_forward.1} parent=0 // pred_check
    _
  $region7: #{block_forward.1} parent=0 // pred_check_branch
    %25 = sbr.rel (0) target = $region9
  $region8: #{block_forward.1} parent=0 // pred_region
    _
  $region9: #{block_forward.1} parent=0 // pred_fallthru
    _
  // Predicated region
  $region10: #{block_forward.1} parent=0 // pred_check
    _
  $region11: #{block_forward.1} parent=0 // pred_check_branch
    %27 = sbr.rel (0) target = $region13
  $region12: #{block_forward.1} parent=0 // pred_region
    _
  $region13: #{block_forward.1} parent=0 // pred_fallthru
    _
  // Predicated region
  $region14: #{block_forward.1} parent=0 // pred_check
    _
  $region15: #{block_forward.1} parent=0 // pred_check_branch
    %29 = sbr.rel (0) target = $region17
  $region16: #{block_forward.1} parent=0 // pred_region
    _
  $region17: #{block_forward.1} parent=0 // pred_fallthru
    _
  // Predicated region
  $region18: #{block_forward.1} parent=0 // pred_check
    _
  $region19: #{block_forward.1} parent=0 // pred_check_branch
    %31 = sbr.rel (0) target = $region21
  $region20: #{block_forward.1} parent=0 // pred_region
    _
  $region21: #{block_forward.1} parent=0 // pred_fallthru
    _
  // Predicated region
  $region22: #{block_forward.1} parent=0 // pred_check
    _
  $region23: #{block_forward.1} parent=0 // pred_check_branch
    %33 = sbr.rel (0) target = $region25
  $region24: #{block_forward.1} parent=0 // pred_region
    _
  $region25: #{block_forward.1} parent=0 // pred_fallthru
    _
  // Predicated region
  $region26: #{block_forward.1} parent=0 // pred_check
    _
  $region27: #{block_forward.1} parent=0 // pred_check_branch
    %35 = sbr.rel (0) target = $region29
  $region28: #{block_forward.1} parent=0 // pred_region
    _
  $region29: #{block_forward.1} parent=0 // pred_fallthru
    _
  // Predicated region
  $region30: #{block_forward.1} parent=0 // pred_check
    _
  $region31: #{block_forward.1} parent=0 // pred_check_branch
    %37 = sbr.rel (0) target = $region33
  $region32: #{block_forward.1} parent=0 // pred_region
    _
  $region33: #{block_forward.1} parent=0 // pred_fallthru
    _
  // Predicated region
  $region34: #{block_forward.1} parent=0 // pred_check
    _
  $region35: #{block_forward.1} parent=0 // pred_check_branch
    %39 = sbr.rel (0) target = $region37
  $region36: #{block_forward.1} parent=0 // pred_region
    _
  $region37: #{block_forward.1} parent=0 // pred_fallthru
    _
  // Predicated region
  $region38: #{block_forward.1} parent=0 // pred_check
    _
  $region39: #{block_forward.1} parent=0 // pred_check_branch
    %41 = sbr.rel (0) target = $region41
  $region40: #{block_forward.1} parent=0 // pred_region
    _
  $region41: #{block_forward.1} parent=0 // pred_fallthru
    _
  // Predicated region
  $region42: #{block_forward.1} parent=0 // pred_check
    _
  $region43: #{block_forward.1} parent=0 // pred_check_branch
    %43 = sbr.rel (0) target = $region45
  $region44: #{block_forward.1} parent=0 // pred_region
    _
  $region45: #{block_forward.1} parent=0 // pred_fallthru
    _
  // Predicated region
  $region46: #{block_forward.1} parent=0 // pred_check
    _
  $region47: #{block_forward.1} parent=0 // pred_check_branch
    %45 = sbr.rel (0) target = $region49
  $region48: #{block_forward.1} parent=0 // pred_region
    _
  $region49: #{block_forward.1} parent=0 // pred_fallthru
    _
  // Predicated region
  $region50: #{block_forward.1} parent=0 // pred_check
    _
  $region51: #{block_forward.1} parent=0 // pred_check_branch
    %47 = sbr.rel (0) target = $region53
  $region52: #{block_forward.1} parent=0 // pred_region
    _
  $region53: #{block_forward.1} parent=0 // pred_fallthru
    _
  // Predicated region
  $region54: #{block_forward.1} parent=0 // pred_check
    _
  $region55: #{block_forward.1} parent=0 // pred_check_branch
    %49 = sbr.rel (0) target = $region57
  $region56: #{block_forward.1} parent=0 // pred_region
    _
  $region57: #{block_forward.1} parent=0 // pred_fallthru
    _
  // Predicated region
  $region58: #{block_forward.1} parent=0 // pred_check
    _
  $region59: #{block_forward.1} parent=0 // pred_check_branch
    %51 = sbr.rel (0) target = $region61
  $region60: #{block_forward.1} parent=0 // pred_region
    _
  $region61: #{block_forward.1} parent=0 // pred_fallthru
    _
  // Predicated region
  $region62: #{block_forward.1} parent=0 // pred_check
    _
  $region63: #{block_forward.1} parent=0 // pred_check_branch
    %53 = sbr.rel (0) target = $region65
  $region64: #{block_forward.1} parent=0 // pred_region
    _
  $region65: #{block_forward.1} parent=0 // pred_fallthru
    _
  // Predicated region
  $region66: #{block_forward.1} parent=0 // pred_check
    _
  $region67: #{block_forward.1} parent=0 // pred_check_branch
    %55 = sbr.rel (0) target = $region69
  $region68: #{block_forward.1} parent=0 // pred_region
    _
  $region69: #{block_forward.1} parent=0 // pred_fallthru
    _
  %v56 = vld [vmem:[%s0] sm:$0xff]
  %v57 = vld [vmem:[%s0 + $0x8] sm:$0xff]
  %v58 = vld [vmem:[%s0 + $0x10] sm:$0xff]
  %v59 = vld [vmem:[%s0 + $0x18] sm:$0xff]
  %s60 = scalar_lea.vmem %s3, 64
  %v61 = vld [vmem:[%s60] sm:$0xff]
  %v62 = vld [vmem:[%s60 + $0x8] sm:$0xff]
  %v63 = vld [vmem:[%s60 + $0x10] sm:$0xff]
  %v64 = vld [vmem:[%s60 + $0x18] sm:$0xff]
  %v65 = vld [vmem:[%s60 + $0x20] sm:$0xff]
  %v66 = vld [vmem:[%s60 + $0x28] sm:$0xff]
  %v67 = vld [vmem:[%s60 + $0x30] sm:$0xff]
  %v68 = vld [vmem:[%s60 + $0x38] sm:$0xff]
  %v69 = vld [vmem:[%s2] sm:$0xff]
  %v70 = vld [vmem:[%s2 + $0x8] sm:$0xff]
  %v71 = vld [vmem:[%s2 + $0x10] sm:$0xff]
  %v72 = vld [vmem:[%s2 + $0x18] sm:$0xff]
  %vm73 = vcmask 261120
  %v75 = vsel %vm73, %v69, 0
  %v78 = vsel %vm73, %v70, 0
  %v81 = vsel %vm73, %v71, 0
  %v84 = vsel %vm73, %v72, 0
  %86 = vmatprep.subr.mxu0 0.0
  %87 = vmatpush1.msra.mxu0 %v56
  %88 = vmatprep.subr.mxu0 0.0
  %89 = vmatpush1.msra.mxu0 %v57
  %90 = vmatprep.subr.mxu0 0.0
  %91 = vmatpush1.msra.mxu0 %v58
  %92 = vmatprep.subr.mxu0 0.0
  %93 = vmatpush1.msra.mxu0 %v59
  %94 = vmatprep.subr.mxu0 0.0
  %95 = vmatpush1.msra.mxu0 0.0
  %96 = vmatprep.subr.mxu0 0.0
  %97 = vmatpush1.msra.mxu0 0.0
  %98 = vmatprep.subr.mxu0 0.0
  %99 = vmatpush1.msra.mxu0 0.0
  %100 = vmatprep.subr.mxu0 0.0
  %101 = vmatpush1.msra.mxu0 0.0
  %102 = vmatprep.subr.mxu0 0.0
  %103 = vmatpush1.msra.mxu0 0.0
  %104 = vmatprep.subr.mxu0 0.0
  %105 = vmatpush1.msra.mxu0 0.0
  %106 = vmatprep.subr.mxu0 0.0
  %107 = vmatpush1.msra.mxu0 0.0
  %108 = vmatprep.subr.mxu0 0.0
  %109 = vmatpush1.msra.mxu0 0.0
  %110 = vmatprep.subr.mxu0 0.0
  %111 = vmatpush1.msra.mxu0 0.0
  %112 = vmatprep.subr.mxu0 0.0
  %113 = vmatpush1.msra.mxu0 0.0
  %114 = vmatprep.subr.mxu0 0.0
  %115 = vmatpush1.msra.mxu0 0.0
  %116 = vmatprep.subr.mxu0 0.0
  %117 = vmatpush1.msra.mxu0 0.0
  %118 = vmatprep.subr.mxu0 0.0
  %119 = vmatpush1.msra.mxu0 0.0
  %120 = vmatprep.subr.mxu0 0.0
  %121 = vmatpush1.msra.mxu0 0.0
  %122 = vmatprep.subr.mxu0 0.0
  %123 = vmatpush1.msra.mxu0 0.0
  %124 = vmatprep.subr.mxu0 0.0
  %125 = vmatpush1.msra.mxu0 0.0
  %126 = vmatprep.subr.mxu0 0.0
  %127 = vmatpush1.msra.mxu0 0.0
  %128 = vmatprep.subr.mxu0 0.0
  %129 = vmatpush1.msra.mxu0 0.0
  %130 = vmatprep.subr.mxu0 0.0
  %131 = vmatpush1.msra.mxu0 0.0
  %132 = vmatprep.subr.mxu0 0.0
  %133 = vmatpush1.msra.mxu0 0.0
  %134 = vmatprep.subr.mxu0 0.0
  %135 = vmatpush1.msra.mxu0 0.0
  %136 = vmatprep.subr.mxu0 0.0
  %137 = vmatpush1.msra.mxu0 0.0
  %138 = vmatprep.subr.mxu0 0.0
  %139 = vmatpush1.msra.mxu0 0.0
  %140 = vmatprep.subr.mxu0 0.0
  %141 = vmatpush1.msra.mxu0 0.0
  %142 = vmatprep.subr.mxu0 0.0
  %143 = vmatpush1.msra.mxu0 0.0
  %144 = vmatprep.subr.mxu0 0.0
  %145 = vmatpush1.msra.mxu0 0.0
  %146 = vmatprep.subr.mxu0 0.0
  %147 = vmatpush1.msra.mxu0 0.0
  %148 = vmatprep.subr.mxu0 0.0
  %149 = vmatpush1.msra.mxu0 0.0
  %150 = vmatprep.mubr.f32.mxu0 0.0
  %151 = vmatmul.mubr.f32.gmra.mrb[0].mxu0 %v75
  %v152 = vpop.f32.mrb[0].mxu0
  %v153 = vadd.f32 0.0, %v152
  %v154 = vpop.f32.mrb[0].mxu0
  %155 = vmatprep.mubr.f32.mxu0 0.0
  %156 = vmatmul.mubr.f32.gmra.mrb[0].mxu0 %v78
  %v157 = vpop.f32.mrb[0].mxu0
  %v158 = vadd.f32 0.0, %v157
  %v159 = vpop.f32.mrb[0].mxu0
  %160 = vmatprep.mubr.f32.mxu0 0.0
  %161 = vmatmul.mubr.f32.gmra.mrb[0].mxu0 %v81
  %v162 = vpop.f32.mrb[0].mxu0
  %v163 = vadd.f32 0.0, %v162
  %v164 = vpop.f32.mrb[0].mxu0
  %165 = vmatprep.mubr.f32.mxu0 0.0
  %166 = vmatmul.mubr.f32.gmra.mrb[0].mxu0 %v84
  %v167 = vpop.f32.mrb[0].mxu0
  %v168 = vadd.f32 0.0, %v167
  %v169 = vpop.f32.mrb[0].mxu0
  %170 = vdwg.mxu0
  %v171 = vld [vmem:[%s3] sm:$0xff]
  %v172 = vld [vmem:[%s3 + $0x8] sm:$0xff]
  %v173 = vld [vmem:[%s3 + $0x10] sm:$0xff]
  %v174 = vld [vmem:[%s3 + $0x18] sm:$0xff]
  %v175 = vld [vmem:[%s3 + $0x20] sm:$0xff]
  %v176 = vld [vmem:[%s3 + $0x28] sm:$0xff]
  %v177 = vld [vmem:[%s3 + $0x30] sm:$0xff]
  %v178 = vld [vmem:[%s3 + $0x38] sm:$0xff]
  %vm179 = vcmask 523264
  %v181 = vsel %vm179, %v153, 0
  %v184 = vsel %vm179, %v158, 0
  %v187 = vsel %vm179, %v163, 0
  %v190 = vsel %vm179, %v168, 0
  %192 = vmatprep.subr.mxu0 0.0
  %193 = vmatpush1.msra.mxu0 %v171
  %194 = vmatprep.subr.mxu0 0.0
  %195 = vmatpush1.msra.mxu0 %v172
  %196 = vmatprep.subr.mxu0 0.0
  %197 = vmatpush1.msra.mxu0 %v173
  %198 = vmatprep.subr.mxu0 0.0
  %199 = vmatpush1.msra.mxu0 %v174
  %200 = vmatprep.subr.mxu0 0.0
  %201 = vmatpush1.msra.mxu0 %v175
  %202 = vmatprep.subr.mxu0 0.0
  %203 = vmatpush1.msra.mxu0 %v176
  %204 = vmatprep.subr.mxu0 0.0
  %205 = vmatpush1.msra.mxu0 %v177
  %206 = vmatprep.subr.mxu0 0.0
  %207 = vmatpush1.msra.mxu0 %v178
  %208 = vmatprep.subr.mxu0 0.0
  %209 = vmatpush1.msra.mxu0 0.0
  %210 = vmatprep.subr.mxu0 0.0
  %211 = vmatpush1.msra.mxu0 0.0
  %212 = vmatprep.subr.mxu0 0.0
  %213 = vmatpush1.msra.mxu0 0.0
  %214 = vmatprep.subr.mxu0 0.0
  %215 = vmatpush1.msra.mxu0 0.0
  %216 = vmatprep.subr.mxu0 0.0
  %217 = vmatpush1.msra.mxu0 0.0
  %218 = vmatprep.subr.mxu0 0.0
  %219 = vmatpush1.msra.mxu0 0.0
  %220 = vmatprep.subr.mxu0 0.0
  %221 = vmatpush1.msra.mxu0 0.0
  %222 = vmatprep.subr.mxu0 0.0
  %223 = vmatpush1.msra.mxu0 0.0
  %224 = vmatprep.subr.mxu0 0.0
  %225 = vmatpush1.msra.mxu0 0.0
  %226 = vmatprep.subr.mxu0 0.0
  %227 = vmatpush1.msra.mxu0 0.0
  %228 = vmatprep.subr.mxu0 0.0
  %229 = vmatpush1.msra.mxu0 0.0
  %230 = vmatprep.subr.mxu0 0.0
  %231 = vmatpush1.msra.mxu0 0.0
  %232 = vmatprep.subr.mxu0 0.0
  %233 = vmatpush1.msra.mxu0 0.0
  %234 = vmatprep.subr.mxu0 0.0
  %235 = vmatpush1.msra.mxu0 0.0
  %236 = vmatprep.subr.mxu0 0.0
  %237 = vmatpush1.msra.mxu0 0.0
  %238 = vmatprep.subr.mxu0 0.0
  %239 = vmatpush1.msra.mxu0 0.0
  %240 = vmatprep.subr.mxu0 0.0
  %241 = vmatpush1.msra.mxu0 0.0
  %242 = vmatprep.subr.mxu0 0.0
  %243 = vmatpush1.msra.mxu0 0.0
  %244 = vmatprep.subr.mxu0 0.0
  %245 = vmatpush1.msra.mxu0 0.0
  %246 = vmatprep.subr.mxu0 0.0
  %247 = vmatpush1.msra.mxu0 0.0
  %248 = vmatprep.subr.mxu0 0.0
  %249 = vmatpush1.msra.mxu0 0.0
  %250 = vmatprep.subr.mxu0 0.0
  %251 = vmatpush1.msra.mxu0 0.0
  %252 = vmatprep.subr.mxu0 0.0
  %253 = vmatpush1.msra.mxu0 0.0
  %254 = vmatprep.subr.mxu0 0.0
  %255 = vmatpush1.msra.mxu0 0.0
  %256 = vmatprep.mubr.f32.mxu0 0.0
  %257 = vmatmul.mubr.f32.gmra.mrb[0].mxu0 %v181
  %v258 = vpop.f32.mrb[0].mxu0
  %v259 = vadd.f32 0.0, %v258
  %v260 = vpop.f32.mrb[0].mxu0
  %261 = vmatprep.mubr.f32.mxu0 0.0
  %262 = vmatmul.mubr.f32.gmra.mrb[0].mxu0 %v184
  %v263 = vpop.f32.mrb[0].mxu0
  %v264 = vadd.f32 0.0, %v263
  %v265 = vpop.f32.mrb[0].mxu0
  %266 = vmatprep.mubr.f32.mxu0 0.0
  %267 = vmatmul.mubr.f32.gmra.mrb[0].mxu0 %v187
  %v268 = vpop.f32.mrb[0].mxu0
  %v269 = vadd.f32 0.0, %v268
  %v270 = vpop.f32.mrb[0].mxu0
  %271 = vmatprep.mubr.f32.mxu0 0.0
  %272 = vmatmul.mubr.f32.gmra.mrb[0].mxu0 %v190
  %v273 = vpop.f32.mrb[0].mxu0
  %v274 = vadd.f32 0.0, %v273
  %v275 = vpop.f32.mrb[0].mxu0
  %276 = vdwg.mxu0
  %v278 = vsel %vm179, %v56, 0
  %v281 = vsel %vm179, %v57, 0
  %v284 = vsel %vm179, %v58, 0
  %v287 = vsel %vm179, %v59, 0
  %289 = vmatprep.subr.mxu0 0.0
  %290 = vmatpush1.msra.mxu0 %v61
  %291 = vmatprep.subr.mxu0 0.0
  %292 = vmatpush1.msra.mxu0 %v62
  %293 = vmatprep.subr.mxu0 0.0
  %294 = vmatpush1.msra.mxu0 %v63
  %295 = vmatprep.subr.mxu0 0.0
  %296 = vmatpush1.msra.mxu0 %v64
  %297 = vmatprep.subr.mxu0 0.0
  %298 = vmatpush1.msra.mxu0 %v65
  %299 = vmatprep.subr.mxu0 0.0
  %300 = vmatpush1.msra.mxu0 %v66
  %301 = vmatprep.subr.mxu0 0.0
  %302 = vmatpush1.msra.mxu0 %v67
  %303 = vmatprep.subr.mxu0 0.0
  %304 = vmatpush1.msra.mxu0 %v68
  %305 = vmatprep.subr.mxu0 0.0
  %306 = vmatpush1.msra.mxu0 0.0
  %307 = vmatprep.subr.mxu0 0.0
  %308 = vmatpush1.msra.mxu0 0.0
  %309 = vmatprep.subr.mxu0 0.0
  %310 = vmatpush1.msra.mxu0 0.0
  %311 = vmatprep.subr.mxu0 0.0
  %312 = vmatpush1.msra.mxu0 0.0
  %313 = vmatprep.subr.mxu0 0.0
  %314 = vmatpush1.msra.mxu0 0.0
  %315 = vmatprep.subr.mxu0 0.0
  %316 = vmatpush1.msra.mxu0 0.0
  %317 = vmatprep.subr.mxu0 0.0
  %318 = vmatpush1.msra.mxu0 0.0
  %319 = vmatprep.subr.mxu0 0.0
  %320 = vmatpush1.msra.mxu0 0.0
  %321 = vmatprep.subr.mxu0 0.0
  %322 = vmatpush1.msra.mxu0 0.0
  %323 = vmatprep.subr.mxu0 0.0
  %324 = vmatpush1.msra.mxu0 0.0
  %325 = vmatprep.subr.mxu0 0.0
  %326 = vmatpush1.msra.mxu0 0.0
  %327 = vmatprep.subr.mxu0 0.0
  %328 = vmatpush1.msra.mxu0 0.0
  %329 = vmatprep.subr.mxu0 0.0
  %330 = vmatpush1.msra.mxu0 0.0
  %331 = vmatprep.subr.mxu0 0.0
  %332 = vmatpush1.msra.mxu0 0.0
  %333 = vmatprep.subr.mxu0 0.0
  %334 = vmatpush1.msra.mxu0 0.0
  %335 = vmatprep.subr.mxu0 0.0
  %336 = vmatpush1.msra.mxu0 0.0
  %337 = vmatprep.subr.mxu0 0.0
  %338 = vmatpush1.msra.mxu0 0.0
  %339 = vmatprep.subr.mxu0 0.0
  %340 = vmatpush1.msra.mxu0 0.0
  %341 = vmatprep.subr.mxu0 0.0
  %342 = vmatpush1.msra.mxu0 0.0
  %343 = vmatprep.subr.mxu0 0.0
  %344 = vmatpush1.msra.mxu0 0.0
  %345 = vmatprep.subr.mxu0 0.0
  %346 = vmatpush1.msra.mxu0 0.0
  %347 = vmatprep.subr.mxu0 0.0
  %348 = vmatpush1.msra.mxu0 0.0
  %349 = vmatprep.subr.mxu0 0.0
  %350 = vmatpush1.msra.mxu0 0.0
  %351 = vmatprep.subr.mxu0 0.0
  %352 = vmatpush1.msra.mxu0 0.0
  %353 = vmatprep.mubr.f32.mxu0 0.0
  %354 = vmatmul.mubr.f32.gmra.mrb[0].mxu0 %v278
  %v355 = vpop.f32.mrb[0].mxu0
  %v356 = vadd.f32 %v259, %v355
  %v357 = vpop.f32.mrb[0].mxu0
  %358 = vmatprep.mubr.f32.mxu0 0.0
  %359 = vmatmul.mubr.f32.gmra.mrb[0].mxu0 %v281
  %v360 = vpop.f32.mrb[0].mxu0
  %v361 = vadd.f32 %v264, %v360
  %v362 = vpop.f32.mrb[0].mxu0
  %363 = vmatprep.mubr.f32.mxu0 0.0
  %364 = vmatmul.mubr.f32.gmra.mrb[0].mxu0 %v284
  %v365 = vpop.f32.mrb[0].mxu0
  %v366 = vadd.f32 %v269, %v365
  %v367 = vpop.f32.mrb[0].mxu0
  %368 = vmatprep.mubr.f32.mxu0 0.0
  %369 = vmatmul.mubr.f32.gmra.mrb[0].mxu0 %v287
  %v370 = vpop.f32.mrb[0].mxu0
  %v371 = vadd.f32 %v274, %v370
  %v372 = vpop.f32.mrb[0].mxu0
  %373 = vdwg.mxu0
  %s374 = scalar_lea.vmem %s2, 32
  %v375 = vld [vmem:[%s374] sm:$0xff]
  %v376 = vld [vmem:[%s374 + $0x8] sm:$0xff]
  %v377 = vld [vmem:[%s374 + $0x10] sm:$0xff]
  %v378 = vld [vmem:[%s374 + $0x18] sm:$0xff]
  %v380 = vsel %vm73, %v375, 0
  %v383 = vsel %vm73, %v376, 0
  %v386 = vsel %vm73, %v377, 0
  %v389 = vsel %vm73, %v378, 0
  %391 = vmatprep.subr.mxu0 0.0
  %392 = vmatpush1.msra.mxu0 %v56
  %393 = vmatprep.subr.mxu0 0.0
  %394 = vmatpush1.msra.mxu0 %v57
  %395 = vmatprep.subr.mxu0 0.0
  %396 = vmatpush1.msra.mxu0 %v58
  %397 = vmatprep.subr.mxu0 0.0
  %398 = vmatpush1.msra.mxu0 %v59
  %399 = vmatprep.subr.mxu0 0.0
  %400 = vmatpush1.msra.mxu0 0.0
  %401 = vmatprep.subr.mxu0 0.0
  %402 = vmatpush1.msra.mxu0 0.0
  %403 = vmatprep.subr.mxu0 0.0
  %404 = vmatpush1.msra.mxu0 0.0
  %405 = vmatprep.subr.mxu0 0.0
  %406 = vmatpush1.msra.mxu0 0.0
  %407 = vmatprep.subr.mxu0 0.0
  %408 = vmatpush1.msra.mxu0 0.0
  %409 = vmatprep.subr.mxu0 0.0
  %410 = vmatpush1.msra.mxu0 0.0
  %411 = vmatprep.subr.mxu0 0.0
  %412 = vmatpush1.msra.mxu0 0.0
  %413 = vmatprep.subr.mxu0 0.0
  %414 = vmatpush1.msra.mxu0 0.0
  %415 = vmatprep.subr.mxu0 0.0
  %416 = vmatpush1.msra.mxu0 0.0
  %417 = vmatprep.subr.mxu0 0.0
  %418 = vmatpush1.msra.mxu0 0.0
  %419 = vmatprep.subr.mxu0 0.0
  %420 = vmatpush1.msra.mxu0 0.0
  %421 = vmatprep.subr.mxu0 0.0
  %422 = vmatpush1.msra.mxu0 0.0
  %423 = vmatprep.subr.mxu0 0.0
  %424 = vmatpush1.msra.mxu0 0.0
  %425 = vmatprep.subr.mxu0 0.0
  %426 = vmatpush1.msra.mxu0 0.0
  %427 = vmatprep.subr.mxu0 0.0
  %428 = vmatpush1.msra.mxu0 0.0
  %429 = vmatprep.subr.mxu0 0.0
  %430 = vmatpush1.msra.mxu0 0.0
  %431 = vmatprep.subr.mxu0 0.0
  %432 = vmatpush1.msra.mxu0 0.0
  %433 = vmatprep.subr.mxu0 0.0
  %434 = vmatpush1.msra.mxu0 0.0
  %435 = vmatprep.subr.mxu0 0.0
  %436 = vmatpush1.msra.mxu0 0.0
  %437 = vmatprep.subr.mxu0 0.0
  %438 = vmatpush1.msra.mxu0 0.0
  %439 = vmatprep.subr.mxu0 0.0
  %440 = vmatpush1.msra.mxu0 0.0
  %441 = vmatprep.subr.mxu0 0.0
  %442 = vmatpush1.msra.mxu0 0.0
  %443 = vmatprep.subr.mxu0 0.0
  %444 = vmatpush1.msra.mxu0 0.0
  %445 = vmatprep.subr.mxu0 0.0
  %446 = vmatpush1.msra.mxu0 0.0
  %447 = vmatprep.subr.mxu0 0.0
  %448 = vmatpush1.msra.mxu0 0.0
  %449 = vmatprep.subr.mxu0 0.0
  %450 = vmatpush1.msra.mxu0 0.0
  %451 = vmatprep.subr.mxu0 0.0
  %452 = vmatpush1.msra.mxu0 0.0
  %453 = vmatprep.subr.mxu0 0.0
  %454 = vmatpush1.msra.mxu0 0.0
  %455 = vmatprep.mubr.f32.mxu0 0.0
  %456 = vmatmul.mubr.f32.gmra.mrb[0].mxu0 %v380
  %v457 = vpop.f32.mrb[0].mxu0
  %v458 = vadd.f32 0.0, %v457
  %v459 = vpop.f32.mrb[0].mxu0
  %460 = vmatprep.mubr.f32.mxu0 0.0
  %461 = vmatmul.mubr.f32.gmra.mrb[0].mxu0 %v383
  %v462 = vpop.f32.mrb[0].mxu0
  %v463 = vadd.f32 0.0, %v462
  %v464 = vpop.f32.mrb[0].mxu0
  %465 = vmatprep.mubr.f32.mxu0 0.0
  %466 = vmatmul.mubr.f32.gmra.mrb[0].mxu0 %v386
  %v467 = vpop.f32.mrb[0].mxu0
  %v468 = vadd.f32 0.0, %v467
  %v469 = vpop.f32.mrb[0].mxu0
  %470 = vmatprep.mubr.f32.mxu0 0.0
  %471 = vmatmul.mubr.f32.gmra.mrb[0].mxu0 %v389
  %v472 = vpop.f32.mrb[0].mxu0
  %v473 = vadd.f32 0.0, %v472
  %v474 = vpop.f32.mrb[0].mxu0
  %475 = vdwg.mxu0
  %s476 = scalar_lea.vmem %s3, 128
  %v477 = vld [vmem:[%s476] sm:$0xff]
  %v478 = vld [vmem:[%s476 + $0x8] sm:$0xff]
  %v479 = vld [vmem:[%s476 + $0x10] sm:$0xff]
  %v480 = vld [vmem:[%s476 + $0x18] sm:$0xff]
  %v481 = vld [vmem:[%s476 + $0x20] sm:$0xff]
  %v482 = vld [vmem:[%s476 + $0x28] sm:$0xff]
  %v483 = vld [vmem:[%s476 + $0x30] sm:$0xff]
  %v484 = vld [vmem:[%s476 + $0x38] sm:$0xff]
  %v486 = vsel %vm179, %v458, 0
  %v489 = vsel %vm179, %v463, 0
  %v492 = vsel %vm179, %v468, 0
  %v495 = vsel %vm179, %v473, 0
  %497 = vmatprep.subr.mxu0 0.0
  %498 = vmatpush1.msra.mxu0 %v477
  %499 = vmatprep.subr.mxu0 0.0
  %500 = vmatpush1.msra.mxu0 %v478
  %501 = vmatprep.subr.mxu0 0.0
  %502 = vmatpush1.msra.mxu0 %v479
  %503 = vmatprep.subr.mxu0 0.0
  %504 = vmatpush1.msra.mxu0 %v480
  %505 = vmatprep.subr.mxu0 0.0
  %506 = vmatpush1.msra.mxu0 %v481
  %507 = vmatprep.subr.mxu0 0.0
  %508 = vmatpush1.msra.mxu0 %v482
  %509 = vmatprep.subr.mxu0 0.0
  %510 = vmatpush1.msra.mxu0 %v483
  %511 = vmatprep.subr.mxu0 0.0
  %512 = vmatpush1.msra.mxu0 %v484
  %513 = vmatprep.subr.mxu0 0.0
  %514 = vmatpush1.msra.mxu0 0.0
  %515 = vmatprep.subr.mxu0 0.0
  %516 = vmatpush1.msra.mxu0 0.0
  %517 = vmatprep.subr.mxu0 0.0
  %518 = vmatpush1.msra.mxu0 0.0
  %519 = vmatprep.subr.mxu0 0.0
  %520 = vmatpush1.msra.mxu0 0.0
  %521 = vmatprep.subr.mxu0 0.0
  %522 = vmatpush1.msra.mxu0 0.0
  %523 = vmatprep.subr.mxu0 0.0
  %524 = vmatpush1.msra.mxu0 0.0
  %525 = vmatprep.subr.mxu0 0.0
  %526 = vmatpush1.msra.mxu0 0.0
  %527 = vmatprep.subr.mxu0 0.0
  %528 = vmatpush1.msra.mxu0 0.0
  %529 = vmatprep.subr.mxu0 0.0
  %530 = vmatpush1.msra.mxu0 0.0
  %531 = vmatprep.subr.mxu0 0.0
  %532 = vmatpush1.msra.mxu0 0.0
  %533 = vmatprep.subr.mxu0 0.0
  %534 = vmatpush1.msra.mxu0 0.0
  %535 = vmatprep.subr.mxu0 0.0
  %536 = vmatpush1.msra.mxu0 0.0
  %537 = vmatprep.subr.mxu0 0.0
  %538 = vmatpush1.msra.mxu0 0.0
  %539 = vmatprep.subr.mxu0 0.0
  %540 = vmatpush1.msra.mxu0 0.0
  %541 = vmatprep.subr.mxu0 0.0
  %542 = vmatpush1.msra.mxu0 0.0
  %543 = vmatprep.subr.mxu0 0.0
  %544 = vmatpush1.msra.mxu0 0.0
  %545 = vmatprep.subr.mxu0 0.0
  %546 = vmatpush1.msra.mxu0 0.0
  %547 = vmatprep.subr.mxu0 0.0
  %548 = vmatpush1.msra.mxu0 0.0
  %549 = vmatprep.subr.mxu0 0.0
  %550 = vmatpush1.msra.mxu0 0.0
  %551 = vmatprep.subr.mxu0 0.0
  %552 = vmatpush1.msra.mxu0 0.0
  %553 = vmatprep.subr.mxu0 0.0
  %554 = vmatpush1.msra.mxu0 0.0
  %555 = vmatprep.subr.mxu0 0.0
  %556 = vmatpush1.msra.mxu0 0.0
  %557 = vmatprep.subr.mxu0 0.0
  %558 = vmatpush1.msra.mxu0 0.0
  %559 = vmatprep.subr.mxu0 0.0
  %560 = vmatpush1.msra.mxu0 0.0
  %561 = vmatprep.mubr.f32.mxu0 0.0
  %562 = vmatmul.mubr.f32.gmra.mrb[0].mxu0 %v486
  %v563 = vpop.f32.mrb[0].mxu0
  %v564 = vadd.f32 0.0, %v563
  %v565 = vpop.f32.mrb[0].mxu0
  %566 = vmatprep.mubr.f32.mxu0 0.0
  %567 = vmatmul.mubr.f32.gmra.mrb[0].mxu0 %v489
  %v568 = vpop.f32.mrb[0].mxu0
  %v569 = vadd.f32 0.0, %v568
  %v570 = vpop.f32.mrb[0].mxu0
  %571 = vmatprep.mubr.f32.mxu0 0.0
  %572 = vmatmul.mubr.f32.gmra.mrb[0].mxu0 %v492
  %v573 = vpop.f32.mrb[0].mxu0
  %v574 = vadd.f32 0.0, %v573
  %v575 = vpop.f32.mrb[0].mxu0
  %576 = vmatprep.mubr.f32.mxu0 0.0
  %577 = vmatmul.mubr.f32.gmra.mrb[0].mxu0 %v495
  %v578 = vpop.f32.mrb[0].mxu0
  %v579 = vadd.f32 0.0, %v578
  %v580 = vpop.f32.mrb[0].mxu0
  %581 = vdwg.mxu0
  %v582 = vadd.f32 %v356, %v564
  %v583 = vadd.f32 %v361, %v569
  %v584 = vadd.f32 %v366, %v574
  %v585 = vadd.f32 %v371, %v579
  %v586 = vld [vmem:[%s4] sm:$0x1]
  %v588 = vlaneseq
  %v589 = vshrl.u32 %v588, 7
  %v590 = vsub.s32 0, %v589
  %v591 = vrot.slane %v586, %v590
  %v593 = vadd.f32 %v582, %v591
  %v594 = vadd.f32 %v583, %v591
  %v595 = vadd.f32 %v584, %v591
  %v596 = vadd.f32 %v585, %v591
  %v597 = vmax.f32 %v593, 0.0
  %v598 = vmax.f32 %v594, 0.0
  %v599 = vmax.f32 %v595, 0.0
  %v600 = vmax.f32 %v596, 0.0
  %v601 = vadd.f32 %v597, %v598
  %v602 = vadd.f32 %v601, %v599
  %v603 = vadd.f32 %v602, %v600
  %v604 = vrot.slane %v603, 4
  %v605 = vadd.f32 %v603, %v604
  %v606 = vrot.slane %v605, 2
  %v607 = vadd.f32 %v605, %v606
  %v608 = vrot.slane %v607, 1
  %v609 = vadd.f32 %v607, %v608
  %v610 = vmul.f32 %v597, %v597
  %v611 = vmul.f32 %v598, %v598
  %v612 = vmul.f32 %v599, %v599
  %v613 = vmul.f32 %v600, %v600
  %v614 = vadd.f32 %v610, %v611
  %v615 = vadd.f32 %v614, %v612
  %v616 = vadd.f32 %v615, %v613
  %v617 = vrot.slane %v616, 4
  %v618 = vadd.f32 %v616, %v617
  %v619 = vrot.slane %v618, 2
  %v620 = vadd.f32 %v618, %v619
  %v621 = vrot.slane %v620, 1
  %v622 = vadd.f32 %v620, %v621
  %v623 = vld [vmem:[%s16] sm:$0xff]
  %v624 = vld [vmem:[%s16 + $0x8] sm:$0xff]
  %v625 = vld [vmem:[%s16 + $0x10] sm:$0xff]
  %v626 = vld [vmem:[%s16 + $0x18] sm:$0xff]
  %v627 = vld [vmem:[%s16 + $0x20] sm:$0xff]
  %v628 = vld [vmem:[%s16 + $0x28] sm:$0xff]
  %v629 = vld [vmem:[%s16 + $0x30] sm:$0xff]
  %v630 = vld [vmem:[%s16 + $0x38] sm:$0xff]
  %v631 = vld [vmem:[%s16 + $0x40] sm:$0xff]
  %v632 = vld [vmem:[%s16 + $0x48] sm:$0xff]
  %v633 = vld [vmem:[%s16 + $0x50] sm:$0xff]
  %v634 = vld [vmem:[%s16 + $0x58] sm:$0xff]
  %v635 = vld [vmem:[%s16 + $0x60] sm:$0xff]
  %v636 = vld [vmem:[%s16 + $0x68] sm:$0xff]
  %v637 = vld [vmem:[%s16 + $0x70] sm:$0xff]
  %v638 = vld [vmem:[%s16 + $0x78] sm:$0xff]
  %639 = vmatprep.subr.mxu0 0.0
  %640 = vmatpush1.msra.mxu0 %v623
  %641 = vmatprep.subr.mxu0 0.0
  %642 = vmatpush1.msra.mxu0 %v624
  %643 = vmatprep.subr.mxu0 0.0
  %644 = vmatpush1.msra.mxu0 %v625
  %645 = vmatprep.subr.mxu0 0.0
  %646 = vmatpush1.msra.mxu0 %v626
  %647 = vmatprep.subr.mxu0 0.0
  %648 = vmatpush1.msra.mxu0 %v627
  %649 = vmatprep.subr.mxu0 0.0
  %650 = vmatpush1.msra.mxu0 %v628
  %651 = vmatprep.subr.mxu0 0.0
  %652 = vmatpush1.msra.mxu0 %v629
  %653 = vmatprep.subr.mxu0 0.0
  %654 = vmatpush1.msra.mxu0 %v630
  %655 = vmatprep.subr.mxu0 0.0
  %656 = vmatpush1.msra.mxu0 %v631
  %657 = vmatprep.subr.mxu0 0.0
  %658 = vmatpush1.msra.mxu0 %v632
  %659 = vmatprep.subr.mxu0 0.0
  %660 = vmatpush1.msra.mxu0 %v633
  %661 = vmatprep.subr.mxu0 0.0
  %662 = vmatpush1.msra.mxu0 %v634
  %663 = vmatprep.subr.mxu0 0.0
  %664 = vmatpush1.msra.mxu0 %v635
  %665 = vmatprep.subr.mxu0 0.0
  %666 = vmatpush1.msra.mxu0 %v636
  %667 = vmatprep.subr.mxu0 0.0
  %668 = vmatpush1.msra.mxu0 %v637
  %669 = vmatprep.subr.mxu0 0.0
  %670 = vmatpush1.msra.mxu0 %v638
  %671 = vmatprep.subr.mxu0 0.0
  %672 = vmatpush1.msra.mxu0 0.0
  %673 = vmatprep.subr.mxu0 0.0
  %674 = vmatpush1.msra.mxu0 0.0
  %675 = vmatprep.subr.mxu0 0.0
  %676 = vmatpush1.msra.mxu0 0.0
  %677 = vmatprep.subr.mxu0 0.0
  %678 = vmatpush1.msra.mxu0 0.0
  %679 = vmatprep.subr.mxu0 0.0
  %680 = vmatpush1.msra.mxu0 0.0
  %681 = vmatprep.subr.mxu0 0.0
  %682 = vmatpush1.msra.mxu0 0.0
  %683 = vmatprep.subr.mxu0 0.0
  %684 = vmatpush1.msra.mxu0 0.0
  %685 = vmatprep.subr.mxu0 0.0
  %686 = vmatpush1.msra.mxu0 0.0
  %687 = vmatprep.subr.mxu0 0.0
  %688 = vmatpush1.msra.mxu0 0.0
  %689 = vmatprep.subr.mxu0 0.0
  %690 = vmatpush1.msra.mxu0 0.0
  %691 = vmatprep.subr.mxu0 0.0
  %692 = vmatpush1.msra.mxu0 0.0
  %693 = vmatprep.subr.mxu0 0.0
  %694 = vmatpush1.msra.mxu0 0.0
  %695 = vmatprep.subr.mxu0 0.0
  %696 = vmatpush1.msra.mxu0 0.0
  %697 = vmatprep.subr.mxu0 0.0
  %698 = vmatpush1.msra.mxu0 0.0
  %699 = vmatprep.subr.mxu0 0.0
  %700 = vmatpush1.msra.mxu0 0.0
  %701 = vmatprep.subr.mxu0 0.0
  %702 = vmatpush1.msra.mxu0 0.0
  %703 = vmatprep.mubr.f32.mxu0 0.0
  %704 = vmatmul.mubr.f32.gmra.mrb[0].mxu0 %v609
  %v705 = vpop.f32.mrb[0].mxu0
  %v706 = vadd.f32 0.0, %v705
  %v707 = vpop.f32.mrb[0].mxu0
  %708 = vdwg.mxu0
  %709 = vmatprep.subr.mxu0 0.0
  %710 = vmatpush1.msra.mxu0 %v623
  %711 = vmatprep.subr.mxu0 0.0
  %712 = vmatpush1.msra.mxu0 %v624
  %713 = vmatprep.subr.mxu0 0.0
  %714 = vmatpush1.msra.mxu0 %v625
  %715 = vmatprep.subr.mxu0 0.0
  %716 = vmatpush1.msra.mxu0 %v626
  %717 = vmatprep.subr.mxu0 0.0
  %718 = vmatpush1.msra.mxu0 %v627
  %719 = vmatprep.subr.mxu0 0.0
  %720 = vmatpush1.msra.mxu0 %v628
  %721 = vmatprep.subr.mxu0 0.0
  %722 = vmatpush1.msra.mxu0 %v629
  %723 = vmatprep.subr.mxu0 0.0
  %724 = vmatpush1.msra.mxu0 %v630
  %725 = vmatprep.subr.mxu0 0.0
  %726 = vmatpush1.msra.mxu0 %v631
  %727 = vmatprep.subr.mxu0 0.0
  %728 = vmatpush1.msra.mxu0 %v632
  %729 = vmatprep.subr.mxu0 0.0
  %730 = vmatpush1.msra.mxu0 %v633
  %731 = vmatprep.subr.mxu0 0.0
  %732 = vmatpush1.msra.mxu0 %v634
  %733 = vmatprep.subr.mxu0 0.0
  %734 = vmatpush1.msra.mxu0 %v635
  %735 = vmatprep.subr.mxu0 0.0
  %736 = vmatpush1.msra.mxu0 %v636
  %737 = vmatprep.subr.mxu0 0.0
  %738 = vmatpush1.msra.mxu0 %v637
  %739 = vmatprep.subr.mxu0 0.0
  %740 = vmatpush1.msra.mxu0 %v638
  %741 = vmatprep.subr.mxu0 0.0
  %742 = vmatpush1.msra.mxu0 0.0
  %743 = vmatprep.subr.mxu0 0.0
  %744 = vmatpush1.msra.mxu0 0.0
  %745 = vmatprep.subr.mxu0 0.0
  %746 = vmatpush1.msra.mxu0 0.0
  %747 = vmatprep.subr.mxu0 0.0
  %748 = vmatpush1.msra.mxu0 0.0
  %749 = vmatprep.subr.mxu0 0.0
  %750 = vmatpush1.msra.mxu0 0.0
  %751 = vmatprep.subr.mxu0 0.0
  %752 = vmatpush1.msra.mxu0 0.0
  %753 = vmatprep.subr.mxu0 0.0
  %754 = vmatpush1.msra.mxu0 0.0
  %755 = vmatprep.subr.mxu0 0.0
  %756 = vmatpush1.msra.mxu0 0.0
  %757 = vmatprep.subr.mxu0 0.0
  %758 = vmatpush1.msra.mxu0 0.0
  %759 = vmatprep.subr.mxu0 0.0
  %760 = vmatpush1.msra.mxu0 0.0
  %761 = vmatprep.subr.mxu0 0.0
  %762 = vmatpush1.msra.mxu0 0.0
  %763 = vmatprep.subr.mxu0 0.0
  %764 = vmatpush1.msra.mxu0 0.0
  %765 = vmatprep.subr.mxu0 0.0
  %766 = vmatpush1.msra.mxu0 0.0
  %767 = vmatprep.subr.mxu0 0.0
  %768 = vmatpush1.msra.mxu0 0.0
  %769 = vmatprep.subr.mxu0 0.0
  %770 = vmatpush1.msra.mxu0 0.0
  %771 = vmatprep.subr.mxu0 0.0
  %772 = vmatpush1.msra.mxu0 0.0
  %773 = vmatprep.mubr.f32.mxu0 0.0
  %774 = vmatmul.mubr.f32.gmra.mrb[0].mxu0 %v622
  %v775 = vpop.f32.mrb[0].mxu0
  %v776 = vadd.f32 0.0, %v775
  %v777 = vpop.f32.mrb[0].mxu0
  %778 = vdwg.mxu0
  %v779 = vmul.f32 %v706, %v706
  %v780 = vsub.f32 %v776, %v779
  %v781 = vlaneseq
  %v782 = vshrl.u32 %v781, 7
  %v783 = vsub.s32 0, %v782
  %v784 = vrot.slane %v706, %v783
  %v785 = vsub.f32 %v597, %v784
  %v786 = vsub.f32 %v598, %v784
  %v787 = vsub.f32 %v599, %v784
  %v788 = vsub.f32 %v600, %v784
  %v789 = vadd.f32 %v780, 1e-05
  %v790 = vrsqrt.pop %v789
  %v791 = vlaneseq
  %v792 = vshrl.u32 %v791, 7
  %v793 = vsub.s32 0, %v792
  %v794 = vrot.slane %v790, %v793
  %v795 = vmul.f32 %v785, %v794
  %v796 = vmul.f32 %v786, %v794
  %v797 = vmul.f32 %v787, %v794
  %v798 = vmul.f32 %v788, %v794
  %v799 = vld [vmem:[%s7] sm:$0x1]
  %v801 = vlaneseq
  %v802 = vshrl.u32 %v801, 7
  %v803 = vsub.s32 0, %v802
  %v804 = vrot.slane %v799, %v803
  %v806 = vmul.f32 %v795, %v804
  %v807 = vmul.f32 %v796, %v804
  %v808 = vmul.f32 %v797, %v804
  %v809 = vmul.f32 %v798, %v804
  %v810 = vld [vmem:[%s8] sm:$0x1]
  %v812 = vlaneseq
  %v813 = vshrl.u32 %v812, 7
  %v814 = vsub.s32 0, %v813
  %v815 = vrot.slane %v810, %v814
  %v817 = vadd.f32 %v806, %v815
  %v818 = vadd.f32 %v807, %v815
  %v819 = vadd.f32 %v808, %v815
  %v820 = vadd.f32 %v809, %v815
  %v821 = vld [vmem:[%s1] sm:$0x3]
  %v822 = vld [vmem:[%s5] sm:$0xff]
  %v823 = vld [vmem:[%s5 + $0x8] sm:$0xff]
  %v824 = vld [vmem:[%s5 + $0x10] sm:$0xff]
  %v825 = vld [vmem:[%s5 + $0x18] sm:$0xff]
  %v826 = vld [vmem:[%s6] sm:$0x1]
  %v828 = vlaneseq
  %v829 = vshrl.u32 %v828, 7
  %v830 = vsub.s32 0, %v829
  %v831 = vrot.slane %v826, %v830
  %v834 = vsel %vm73, %v821, 0
  %836 = vmatprep.subr.mxu0 0.0
  %837 = vmatpush1.msra.mxu0 %v822
  %838 = vmatprep.subr.mxu0 0.0
  %839 = vmatpush1.msra.mxu0 %v823
  %840 = vmatprep.subr.mxu0 0.0
  %841 = vmatpush1.msra.mxu0 %v824
  %842 = vmatprep.subr.mxu0 0.0
  %843 = vmatpush1.msra.mxu0 %v825
  %844 = vmatprep.subr.mxu0 0.0
  %845 = vmatpush1.msra.mxu0 0.0
  %846 = vmatprep.subr.mxu0 0.0
  %847 = vmatpush1.msra.mxu0 0.0
  %848 = vmatprep.subr.mxu0 0.0
  %849 = vmatpush1.msra.mxu0 0.0
  %850 = vmatprep.subr.mxu0 0.0
  %851 = vmatpush1.msra.mxu0 0.0
  %852 = vmatprep.subr.mxu0 0.0
  %853 = vmatpush1.msra.mxu0 0.0
  %854 = vmatprep.subr.mxu0 0.0
  %855 = vmatpush1.msra.mxu0 0.0
  %856 = vmatprep.subr.mxu0 0.0
  %857 = vmatpush1.msra.mxu0 0.0
  %858 = vmatprep.subr.mxu0 0.0
  %859 = vmatpush1.msra.mxu0 0.0
  %860 = vmatprep.subr.mxu0 0.0
  %861 = vmatpush1.msra.mxu0 0.0
  %862 = vmatprep.subr.mxu0 0.0
  %863 = vmatpush1.msra.mxu0 0.0
  %864 = vmatprep.subr.mxu0 0.0
  %865 = vmatpush1.msra.mxu0 0.0
  %866 = vmatprep.subr.mxu0 0.0
  %867 = vmatpush1.msra.mxu0 0.0
  %868 = vmatprep.subr.mxu0 0.0
  %869 = vmatpush1.msra.mxu0 0.0
  %870 = vmatprep.subr.mxu0 0.0
  %871 = vmatpush1.msra.mxu0 0.0
  %872 = vmatprep.subr.mxu0 0.0
  %873 = vmatpush1.msra.mxu0 0.0
  %874 = vmatprep.subr.mxu0 0.0
  %875 = vmatpush1.msra.mxu0 0.0
  %876 = vmatprep.subr.mxu0 0.0
  %877 = vmatpush1.msra.mxu0 0.0
  %878 = vmatprep.subr.mxu0 0.0
  %879 = vmatpush1.msra.mxu0 0.0
  %880 = vmatprep.subr.mxu0 0.0
  %881 = vmatpush1.msra.mxu0 0.0
  %882 = vmatprep.subr.mxu0 0.0
  %883 = vmatpush1.msra.mxu0 0.0
  %884 = vmatprep.subr.mxu0 0.0
  %885 = vmatpush1.msra.mxu0 0.0
  %886 = vmatprep.subr.mxu0 0.0
  %887 = vmatpush1.msra.mxu0 0.0
  %888 = vmatprep.subr.mxu0 0.0
  %889 = vmatpush1.msra.mxu0 0.0
  %890 = vmatprep.subr.mxu0 0.0
  %891 = vmatpush1.msra.mxu0 0.0
  %892 = vmatprep.subr.mxu0 0.0
  %893 = vmatpush1.msra.mxu0 0.0
  %894 = vmatprep.subr.mxu0 0.0
  %895 = vmatpush1.msra.mxu0 0.0
  %896 = vmatprep.subr.mxu0 0.0
  %897 = vmatpush1.msra.mxu0 0.0
  %898 = vmatprep.subr.mxu0 0.0
  %899 = vmatpush1.msra.mxu0 0.0
  %900 = vmatprep.mubr.f32.mxu0 0.0
  %901 = vmatmul.mubr.f32.gmra.mrb[0].mxu0 %v834
  %v902 = vpop.f32.mrb[0].mxu0
  %v903 = vadd.f32 %v831, %v902
  %v904 = vpop.f32.mrb[0].mxu0
  %905 = vdwg.mxu0
  %v906 = vmax.f32 %v903, 0.0
  %v909 = vunpack.c.l.s4 1966171168
  %v910 = vunpack.c.0.s8 %v909
  %v911 = vlaneseq
  %v912 = vshrl.u32 %v911, 7
  %v913 = vsub.s32 %v910, %v912
  %v914 = vrot.slane %v906, %v913
  %v915 = vcombine.high %v914, %v914
  %v917 = vunpack.c.l.s4 1966171168
  %v918 = vunpack.c.0.s8 %v917
  %v919 = vlaneseq
  %v920 = vshrl.u32 %v919, 7
  %v921 = vsub.s32 %v918, %v920
  %v922 = vrot.slane %v914, %v921
  %v924 = vunpack.c.l.s4 1966171168
  %v925 = vunpack.c.0.s8 %v924
  %v926 = vlaneseq
  %v927 = vshrl.u32 %v926, 7
  %v928 = vsub.s32 %v925, %v927
  %v929 = vrot.slane %v915, %v928
  %v930 = vlaneseq
  %v931 = vshrl.u32 %v930, 7
  %v932 = vsub.s32 0, %v931
  %v933 = vrot.slane %v922, %v932
  %v934 = vlaneseq
  %v935 = vshrl.u32 %v934, 7
  %v936 = vsub.s32 0, %v935
  %v937 = vrot.slane %v929, %v936
  %v940 = vadd.f32 %v817, %v933
  %v941 = vadd.f32 %v818, %v933
  %v942 = vadd.f32 %v819, %v937
  %v943 = vadd.f32 %v820, %v937
  %s944 = scalar_lea.vmem %s9, 128
  %v945 = vld [vmem:[%s944] sm:$0xff]
  %v946 = vld [vmem:[%s944 + $0x8] sm:$0xff]
  %v947 = vld [vmem:[%s944 + $0x10] sm:$0xff]
  %v948 = vld [vmem:[%s944 + $0x18] sm:$0xff]
  %v949 = vld [vmem:[%s944 + $0x20] sm:$0xff]
  %v950 = vld [vmem:[%s944 + $0x28] sm:$0xff]
  %v951 = vld [vmem:[%s944 + $0x30] sm:$0xff]
  %v952 = vld [vmem:[%s944 + $0x38] sm:$0xff]
  %v953 = vld [vmem:[%s944 + $0x40] sm:$0xff]
  %v954 = vld [vmem:[%s944 + $0x48] sm:$0xff]
  %v955 = vld [vmem:[%s944 + $0x50] sm:$0xff]
  %v956 = vld [vmem:[%s944 + $0x58] sm:$0xff]
  %v957 = vld [vmem:[%s944 + $0x60] sm:$0xff]
  %v958 = vld [vmem:[%s944 + $0x68] sm:$0xff]
  %v959 = vld [vmem:[%s944 + $0x70] sm:$0xff]
  %v960 = vld [vmem:[%s944 + $0x78] sm:$0xff]
  %961 = vmatprep.subr.mxu0 0.0
  %962 = vmatpush1.msra.mxu0 %v940
  %963 = vmatprep.subr.mxu0 0.0
  %964 = vmatpush1.msra.mxu0 %v941
  %965 = vmatprep.subr.mxu0 0.0
  %966 = vmatpush1.msra.mxu0 %v942
  %967 = vmatprep.subr.mxu0 0.0
  %968 = vmatpush1.msra.mxu0 %v943
  %969 = vmatprep.subr.mxu0 0.0
  %970 = vmatpush1.msra.mxu0 0.0
  %971 = vmatprep.subr.mxu0 0.0
  %972 = vmatpush1.msra.mxu0 0.0
  %973 = vmatprep.subr.mxu0 0.0
  %974 = vmatpush1.msra.mxu0 0.0
  %975 = vmatprep.subr.mxu0 0.0
  %976 = vmatpush1.msra.mxu0 0.0
  %977 = vmatprep.subr.mxu0 0.0
  %978 = vmatpush1.msra.mxu0 0.0
  %979 = vmatprep.subr.mxu0 0.0
  %980 = vmatpush1.msra.mxu0 0.0
  %981 = vmatprep.subr.mxu0 0.0
  %982 = vmatpush1.msra.mxu0 0.0
  %983 = vmatprep.subr.mxu0 0.0
  %984 = vmatpush1.msra.mxu0 0.0
  %985 = vmatprep.subr.mxu0 0.0
  %986 = vmatpush1.msra.mxu0 0.0
  %987 = vmatprep.subr.mxu0 0.0
  %988 = vmatpush1.msra.mxu0 0.0
  %989 = vmatprep.subr.mxu0 0.0
  %990 = vmatpush1.msra.mxu0 0.0
  %991 = vmatprep.subr.mxu0 0.0
  %992 = vmatpush1.msra.mxu0 0.0
  %993 = vmatprep.subr.mxu0 0.0
  %994 = vmatpush1.msra.mxu0 0.0
  %995 = vmatprep.subr.mxu0 0.0
  %996 = vmatpush1.msra.mxu0 0.0
  %997 = vmatprep.subr.mxu0 0.0
  %998 = vmatpush1.msra.mxu0 0.0
  %999 = vmatprep.subr.mxu0 0.0
  %1000 = vmatpush1.msra.mxu0 0.0
  %1001 = vmatprep.subr.mxu0 0.0
  %1002 = vmatpush1.msra.mxu0 0.0
  %1003 = vmatprep.subr.mxu0 0.0
  %1004 = vmatpush1.msra.mxu0 0.0
  %1005 = vmatprep.subr.mxu0 0.0
  %1006 = vmatpush1.msra.mxu0 0.0
  %1007 = vmatprep.subr.mxu0 0.0
  %1008 = vmatpush1.msra.mxu0 0.0
  %1009 = vmatprep.subr.mxu0 0.0
  %1010 = vmatpush1.msra.mxu0 0.0
  %1011 = vmatprep.subr.mxu0 0.0
  %1012 = vmatpush1.msra.mxu0 0.0
  %1013 = vmatprep.subr.mxu0 0.0
  %1014 = vmatpush1.msra.mxu0 0.0
  %1015 = vmatprep.subr.mxu0 0.0
  %1016 = vmatpush1.msra.mxu0 0.0
  %1017 = vmatprep.subr.mxu0 0.0
  %1018 = vmatpush1.msra.mxu0 0.0
  %1019 = vmatprep.subr.mxu0 0.0
  %1020 = vmatpush1.msra.mxu0 0.0
  %1021 = vmatprep.subr.mxu0 0.0
  %1022 = vmatpush1.msra.mxu0 0.0
  %1023 = vmatprep.subr.mxu0 0.0
  %1024 = vmatpush1.msra.mxu0 0.0
  %1025 = vmatprep.mubr.f32.mxu0 0.0
  %1026 = vmatmul.mubr.f32.gmra.mrb[0].mxu0 %v75
  %v1027 = vpop.f32.mrb[0].mxu0
  %v1028 = vadd.f32 0.0, %v1027
  %v1029 = vpop.f32.mrb[0].mxu0
  %1030 = vmatprep.mubr.f32.mxu0 0.0
  %1031 = vmatmul.mubr.f32.gmra.mrb[0].mxu0 %v78
  %v1032 = vpop.f32.mrb[0].mxu0
  %v1033 = vadd.f32 0.0, %v1032
  %v1034 = vpop.f32.mrb[0].mxu0
  %1035 = vmatprep.mubr.f32.mxu0 0.0
  %1036 = vmatmul.mubr.f32.gmra.mrb[0].mxu0 %v81
  %v1037 = vpop.f32.mrb[0].mxu0
  %v1038 = vadd.f32 0.0, %v1037
  %v1039 = vpop.f32.mrb[0].mxu0
  %1040 = vmatprep.mubr.f32.mxu0 0.0
  %1041 = vmatmul.mubr.f32.gmra.mrb[0].mxu0 %v84
  %v1042 = vpop.f32.mrb[0].mxu0
  %v1043 = vadd.f32 0.0, %v1042
  %v1044 = vpop.f32.mrb[0].mxu0
  %1045 = vdwg.mxu0
  %v1046 = vld [vmem:[%s9] sm:$0xff]
  %v1047 = vld [vmem:[%s9 + $0x8] sm:$0xff]
  %v1048 = vld [vmem:[%s9 + $0x10] sm:$0xff]
  %v1049 = vld [vmem:[%s9 + $0x18] sm:$0xff]
  %v1050 = vld [vmem:[%s9 + $0x20] sm:$0xff]
  %v1051 = vld [vmem:[%s9 + $0x28] sm:$0xff]
  %v1052 = vld [vmem:[%s9 + $0x30] sm:$0xff]
  %v1053 = vld [vmem:[%s9 + $0x38] sm:$0xff]
  %v1054 = vld [vmem:[%s9 + $0x40] sm:$0xff]
  %v1055 = vld [vmem:[%s9 + $0x48] sm:$0xff]
  %v1056 = vld [vmem:[%s9 + $0x50] sm:$0xff]
  %v1057 = vld [vmem:[%s9 + $0x58] sm:$0xff]
  %v1058 = vld [vmem:[%s9 + $0x60] sm:$0xff]
  %v1059 = vld [vmem:[%s9 + $0x68] sm:$0xff]
  %v1060 = vld [vmem:[%s9 + $0x70] sm:$0xff]
  %v1061 = vld [vmem:[%s9 + $0x78] sm:$0xff]
  %1062 = vmatprep.subr.mxu0 0.0
  %1063 = vmatpush1.msra.mxu0 %v1046
  %1064 = vmatprep.subr.mxu0 0.0
  %1065 = vmatpush1.msra.mxu0 %v1047
  %1066 = vmatprep.subr.mxu0 0.0
  %1067 = vmatpush1.msra.mxu0 %v1048
  %1068 = vmatprep.subr.mxu0 0.0
  %1069 = vmatpush1.msra.mxu0 %v1049
  %1070 = vmatprep.subr.mxu0 0.0
  %1071 = vmatpush1.msra.mxu0 %v1050
  %1072 = vmatprep.subr.mxu0 0.0
  %1073 = vmatpush1.msra.mxu0 %v1051
  %1074 = vmatprep.subr.mxu0 0.0
  %1075 = vmatpush1.msra.mxu0 %v1052
  %1076 = vmatprep.subr.mxu0 0.0
  %1077 = vmatpush1.msra.mxu0 %v1053
  %1078 = vmatprep.subr.mxu0 0.0
  %1079 = vmatpush1.msra.mxu0 %v1054
  %1080 = vmatprep.subr.mxu0 0.0
  %1081 = vmatpush1.msra.mxu0 %v1055
  %1082 = vmatprep.subr.mxu0 0.0
  %1083 = vmatpush1.msra.mxu0 %v1056
  %1084 = vmatprep.subr.mxu0 0.0
  %1085 = vmatpush1.msra.mxu0 %v1057
  %1086 = vmatprep.subr.mxu0 0.0
  %1087 = vmatpush1.msra.mxu0 %v1058
  %1088 = vmatprep.subr.mxu0 0.0
  %1089 = vmatpush1.msra.mxu0 %v1059
  %1090 = vmatprep.subr.mxu0 0.0
  %1091 = vmatpush1.msra.mxu0 %v1060
  %1092 = vmatprep.subr.mxu0 0.0
  %1093 = vmatpush1.msra.mxu0 %v1061
  %1094 = vmatprep.subr.mxu0 0.0
  %1095 = vmatpush1.msra.mxu0 0.0
  %1096 = vmatprep.subr.mxu0 0.0
  %1097 = vmatpush1.msra.mxu0 0.0
  %1098 = vmatprep.subr.mxu0 0.0
  %1099 = vmatpush1.msra.mxu0 0.0
  %1100 = vmatprep.subr.mxu0 0.0
  %1101 = vmatpush1.msra.mxu0 0.0
  %1102 = vmatprep.subr.mxu0 0.0
  %1103 = vmatpush1.msra.mxu0 0.0
  %1104 = vmatprep.subr.mxu0 0.0
  %1105 = vmatpush1.msra.mxu0 0.0
  %1106 = vmatprep.subr.mxu0 0.0
  %1107 = vmatpush1.msra.mxu0 0.0
  %1108 = vmatprep.subr.mxu0 0.0
  %1109 = vmatpush1.msra.mxu0 0.0
  %1110 = vmatprep.subr.mxu0 0.0
  %1111 = vmatpush1.msra.mxu0 0.0
  %1112 = vmatprep.subr.mxu0 0.0
  %1113 = vmatpush1.msra.mxu0 0.0
  %1114 = vmatprep.subr.mxu0 0.0
  %1115 = vmatpush1.msra.mxu0 0.0
  %1116 = vmatprep.subr.mxu0 0.0
  %1117 = vmatpush1.msra.mxu0 0.0
  %1118 = vmatprep.subr.mxu0 0.0
  %1119 = vmatpush1.msra.mxu0 0.0
  %1120 = vmatprep.subr.mxu0 0.0
  %1121 = vmatpush1.msra.mxu0 0.0
  %1122 = vmatprep.subr.mxu0 0.0
  %1123 = vmatpush1.msra.mxu0 0.0
  %1124 = vmatprep.subr.mxu0 0.0
  %1125 = vmatpush1.msra.mxu0 0.0
  %1126 = vmatprep.mubr.f32.mxu0 0.0
  %1127 = vmatmul.mubr.f32.gmra.mrb[0].mxu0 %v1028
  %v1128 = vpop.f32.mrb[0].mxu0
  %v1129 = vadd.f32 0.0, %v1128
  %v1130 = vpop.f32.mrb[0].mxu0
  %1131 = vmatprep.mubr.f32.mxu0 0.0
  %1132 = vmatmul.mubr.f32.gmra.mrb[0].mxu0 %v1033
  %v1133 = vpop.f32.mrb[0].mxu0
  %v1134 = vadd.f32 0.0, %v1133
  %v1135 = vpop.f32.mrb[0].mxu0
  %1136 = vmatprep.mubr.f32.mxu0 0.0
  %1137 = vmatmul.mubr.f32.gmra.mrb[0].mxu0 %v1038
  %v1138 = vpop.f32.mrb[0].mxu0
  %v1139 = vadd.f32 0.0, %v1138
  %v1140 = vpop.f32.mrb[0].mxu0
  %1141 = vmatprep.mubr.f32.mxu0 0.0
  %1142 = vmatmul.mubr.f32.gmra.mrb[0].mxu0 %v1043
  %v1143 = vpop.f32.mrb[0].mxu0
  %v1144 = vadd.f32 0.0, %v1143
  %v1145 = vpop.f32.mrb[0].mxu0
  %1146 = vdwg.mxu0
  %1147 = vmatprep.subr.mxu0 0.0
  %1148 = vmatpush1.msra.mxu0 %v945
  %1149 = vmatprep.subr.mxu0 0.0
  %1150 = vmatpush1.msra.mxu0 %v946
  %1151 = vmatprep.subr.mxu0 0.0
  %1152 = vmatpush1.msra.mxu0 %v947
  %1153 = vmatprep.subr.mxu0 0.0
  %1154 = vmatpush1.msra.mxu0 %v948
  %1155 = vmatprep.subr.mxu0 0.0
  %1156 = vmatpush1.msra.mxu0 %v949
  %1157 = vmatprep.subr.mxu0 0.0
  %1158 = vmatpush1.msra.mxu0 %v950
  %1159 = vmatprep.subr.mxu0 0.0
  %1160 = vmatpush1.msra.mxu0 %v951
  %1161 = vmatprep.subr.mxu0 0.0
  %1162 = vmatpush1.msra.mxu0 %v952
  %1163 = vmatprep.subr.mxu0 0.0
  %1164 = vmatpush1.msra.mxu0 %v953
  %1165 = vmatprep.subr.mxu0 0.0
  %1166 = vmatpush1.msra.mxu0 %v954
  %1167 = vmatprep.subr.mxu0 0.0
  %1168 = vmatpush1.msra.mxu0 %v955
  %1169 = vmatprep.subr.mxu0 0.0
  %1170 = vmatpush1.msra.mxu0 %v956
  %1171 = vmatprep.subr.mxu0 0.0
  %1172 = vmatpush1.msra.mxu0 %v957
  %1173 = vmatprep.subr.mxu0 0.0
  %1174 = vmatpush1.msra.mxu0 %v958
  %1175 = vmatprep.subr.mxu0 0.0
  %1176 = vmatpush1.msra.mxu0 %v959
  %1177 = vmatprep.subr.mxu0 0.0
  %1178 = vmatpush1.msra.mxu0 %v960
  %1179 = vmatprep.subr.mxu0 0.0
  %1180 = vmatpush1.msra.mxu0 0.0
  %1181 = vmatprep.subr.mxu0 0.0
  %1182 = vmatpush1.msra.mxu0 0.0
  %1183 = vmatprep.subr.mxu0 0.0
  %1184 = vmatpush1.msra.mxu0 0.0
  %1185 = vmatprep.subr.mxu0 0.0
  %1186 = vmatpush1.msra.mxu0 0.0
  %1187 = vmatprep.subr.mxu0 0.0
  %1188 = vmatpush1.msra.mxu0 0.0
  %1189 = vmatprep.subr.mxu0 0.0
  %1190 = vmatpush1.msra.mxu0 0.0
  %1191 = vmatprep.subr.mxu0 0.0
  %1192 = vmatpush1.msra.mxu0 0.0
  %1193 = vmatprep.subr.mxu0 0.0
  %1194 = vmatpush1.msra.mxu0 0.0
  %1195 = vmatprep.subr.mxu0 0.0
  %1196 = vmatpush1.msra.mxu0 0.0
  %1197 = vmatprep.subr.mxu0 0.0
  %1198 = vmatpush1.msra.mxu0 0.0
  %1199 = vmatprep.subr.mxu0 0.0
  %1200 = vmatpush1.msra.mxu0 0.0
  %1201 = vmatprep.subr.mxu0 0.0
  %1202 = vmatpush1.msra.mxu0 0.0
  %1203 = vmatprep.subr.mxu0 0.0
  %1204 = vmatpush1.msra.mxu0 0.0
  %1205 = vmatprep.subr.mxu0 0.0
  %1206 = vmatpush1.msra.mxu0 0.0
  %1207 = vmatprep.subr.mxu0 0.0
  %1208 = vmatpush1.msra.mxu0 0.0
  %1209 = vmatprep.subr.mxu0 0.0
  %1210 = vmatpush1.msra.mxu0 0.0
  %1211 = vmatprep.mubr.f32.mxu0 0.0
  %1212 = vmatmul.mubr.f32.gmra.mrb[0].mxu0 %v940
  %v1213 = vpop.f32.mrb[0].mxu0
  %v1214 = vadd.f32 %v1129, %v1213
  %v1215 = vpop.f32.mrb[0].mxu0
  %1216 = vmatprep.mubr.f32.mxu0 0.0
  %1217 = vmatmul.mubr.f32.gmra.mrb[0].mxu0 %v941
  %v1218 = vpop.f32.mrb[0].mxu0
  %v1219 = vadd.f32 %v1134, %v1218
  %v1220 = vpop.f32.mrb[0].mxu0
  %1221 = vmatprep.mubr.f32.mxu0 0.0
  %1222 = vmatmul.mubr.f32.gmra.mrb[0].mxu0 %v942
  %v1223 = vpop.f32.mrb[0].mxu0
  %v1224 = vadd.f32 %v1139, %v1223
  %v1225 = vpop.f32.mrb[0].mxu0
  %1226 = vmatprep.mubr.f32.mxu0 0.0
  %1227 = vmatmul.mubr.f32.gmra.mrb[0].mxu0 %v943
  %v1228 = vpop.f32.mrb[0].mxu0
  %v1229 = vadd.f32 %v1144, %v1228
  %v1230 = vpop.f32.mrb[0].mxu0
  %1231 = vdwg.mxu0
  %1232 = vmatprep.subr.mxu0 0.0
  %1233 = vmatpush1.msra.mxu0 %v940
  %1234 = vmatprep.subr.mxu0 0.0
  %1235 = vmatpush1.msra.mxu0 %v941
  %1236 = vmatprep.subr.mxu0 0.0
  %1237 = vmatpush1.msra.mxu0 %v942
  %1238 = vmatprep.subr.mxu0 0.0
  %1239 = vmatpush1.msra.mxu0 %v943
  %1240 = vmatprep.subr.mxu0 0.0
  %1241 = vmatpush1.msra.mxu0 0.0
  %1242 = vmatprep.subr.mxu0 0.0
  %1243 = vmatpush1.msra.mxu0 0.0
  %1244 = vmatprep.subr.mxu0 0.0
  %1245 = vmatpush1.msra.mxu0 0.0
  %1246 = vmatprep.subr.mxu0 0.0
  %1247 = vmatpush1.msra.mxu0 0.0
  %1248 = vmatprep.subr.mxu0 0.0
  %1249 = vmatpush1.msra.mxu0 0.0
  %1250 = vmatprep.subr.mxu0 0.0
  %1251 = vmatpush1.msra.mxu0 0.0
  %1252 = vmatprep.subr.mxu0 0.0
  %1253 = vmatpush1.msra.mxu0 0.0
  %1254 = vmatprep.subr.mxu0 0.0
  %1255 = vmatpush1.msra.mxu0 0.0
  %1256 = vmatprep.subr.mxu0 0.0
  %1257 = vmatpush1.msra.mxu0 0.0
  %1258 = vmatprep.subr.mxu0 0.0
  %1259 = vmatpush1.msra.mxu0 0.0
  %1260 = vmatprep.subr.mxu0 0.0
  %1261 = vmatpush1.msra.mxu0 0.0
  %1262 = vmatprep.subr.mxu0 0.0
  %1263 = vmatpush1.msra.mxu0 0.0
  %1264 = vmatprep.subr.mxu0 0.0
  %1265 = vmatpush1.msra.mxu0 0.0
  %1266 = vmatprep.subr.mxu0 0.0
  %1267 = vmatpush1.msra.mxu0 0.0
  %1268 = vmatprep.subr.mxu0 0.0
  %1269 = vmatpush1.msra.mxu0 0.0
  %1270 = vmatprep.subr.mxu0 0.0
  %1271 = vmatpush1.msra.mxu0 0.0
  %1272 = vmatprep.subr.mxu0 0.0
  %1273 = vmatpush1.msra.mxu0 0.0
  %1274 = vmatprep.subr.mxu0 0.0
  %1275 = vmatpush1.msra.mxu0 0.0
  %1276 = vmatprep.subr.mxu0 0.0
  %1277 = vmatpush1.msra.mxu0 0.0
  %1278 = vmatprep.subr.mxu0 0.0
  %1279 = vmatpush1.msra.mxu0 0.0
  %1280 = vmatprep.subr.mxu0 0.0
  %1281 = vmatpush1.msra.mxu0 0.0
  %1282 = vmatprep.subr.mxu0 0.0
  %1283 = vmatpush1.msra.mxu0 0.0
  %1284 = vmatprep.subr.mxu0 0.0
  %1285 = vmatpush1.msra.mxu0 0.0
  %1286 = vmatprep.subr.mxu0 0.0
  %1287 = vmatpush1.msra.mxu0 0.0
  %1288 = vmatprep.subr.mxu0 0.0
  %1289 = vmatpush1.msra.mxu0 0.0
  %1290 = vmatprep.subr.mxu0 0.0
  %1291 = vmatpush1.msra.mxu0 0.0
  %1292 = vmatprep.subr.mxu0 0.0
  %1293 = vmatpush1.msra.mxu0 0.0
  %1294 = vmatprep.subr.mxu0 0.0
  %1295 = vmatpush1.msra.mxu0 0.0
  %1296 = vmatprep.mubr.f32.mxu0 0.0
  %1297 = vmatmul.mubr.f32.gmra.mrb[0].mxu0 %v380
  %v1298 = vpop.f32.mrb[0].mxu0
  %v1299 = vadd.f32 0.0, %v1298
  %v1300 = vpop.f32.mrb[0].mxu0
  %1301 = vmatprep.mubr.f32.mxu0 0.0
  %1302 = vmatmul.mubr.f32.gmra.mrb[0].mxu0 %v383
  %v1303 = vpop.f32.mrb[0].mxu0
  %v1304 = vadd.f32 0.0, %v1303
  %v1305 = vpop.f32.mrb[0].mxu0
  %1306 = vmatprep.mubr.f32.mxu0 0.0
  %1307 = vmatmul.mubr.f32.gmra.mrb[0].mxu0 %v386
  %v1308 = vpop.f32.mrb[0].mxu0
  %v1309 = vadd.f32 0.0, %v1308
  %v1310 = vpop.f32.mrb[0].mxu0
  %1311 = vmatprep.mubr.f32.mxu0 0.0
  %1312 = vmatmul.mubr.f32.gmra.mrb[0].mxu0 %v389
  %v1313 = vpop.f32.mrb[0].mxu0
  %v1314 = vadd.f32 0.0, %v1313
  %v1315 = vpop.f32.mrb[0].mxu0
  %1316 = vdwg.mxu0
  %s1317 = scalar_lea.vmem %s9, 256
  %v1318 = vld [vmem:[%s1317] sm:$0xff]
  %v1319 = vld [vmem:[%s1317 + $0x8] sm:$0xff]
  %v1320 = vld [vmem:[%s1317 + $0x10] sm:$0xff]
  %v1321 = vld [vmem:[%s1317 + $0x18] sm:$0xff]
  %v1322 = vld [vmem:[%s1317 + $0x20] sm:$0xff]
  %v1323 = vld [vmem:[%s1317 + $0x28] sm:$0xff]
  %v1324 = vld [vmem:[%s1317 + $0x30] sm:$0xff]
  %v1325 = vld [vmem:[%s1317 + $0x38] sm:$0xff]
  %v1326 = vld [vmem:[%s1317 + $0x40] sm:$0xff]
  %v1327 = vld [vmem:[%s1317 + $0x48] sm:$0xff]
  %v1328 = vld [vmem:[%s1317 + $0x50] sm:$0xff]
  %v1329 = vld [vmem:[%s1317 + $0x58] sm:$0xff]
  %v1330 = vld [vmem:[%s1317 + $0x60] sm:$0xff]
  %v1331 = vld [vmem:[%s1317 + $0x68] sm:$0xff]
  %v1332 = vld [vmem:[%s1317 + $0x70] sm:$0xff]
  %v1333 = vld [vmem:[%s1317 + $0x78] sm:$0xff]
  %1334 = vmatprep.subr.mxu0 0.0
  %1335 = vmatpush1.msra.mxu0 %v1318
  %1336 = vmatprep.subr.mxu0 0.0
  %1337 = vmatpush1.msra.mxu0 %v1319
  %1338 = vmatprep.subr.mxu0 0.0
  %1339 = vmatpush1.msra.mxu0 %v1320
  %1340 = vmatprep.subr.mxu0 0.0
  %1341 = vmatpush1.msra.mxu0 %v1321
  %1342 = vmatprep.subr.mxu0 0.0
  %1343 = vmatpush1.msra.mxu0 %v1322
  %1344 = vmatprep.subr.mxu0 0.0
  %1345 = vmatpush1.msra.mxu0 %v1323
  %1346 = vmatprep.subr.mxu0 0.0
  %1347 = vmatpush1.msra.mxu0 %v1324
  %1348 = vmatprep.subr.mxu0 0.0
  %1349 = vmatpush1.msra.mxu0 %v1325
  %1350 = vmatprep.subr.mxu0 0.0
  %1351 = vmatpush1.msra.mxu0 %v1326
  %1352 = vmatprep.subr.mxu0 0.0
  %1353 = vmatpush1.msra.mxu0 %v1327
  %1354 = vmatprep.subr.mxu0 0.0
  %1355 = vmatpush1.msra.mxu0 %v1328
  %1356 = vmatprep.subr.mxu0 0.0
  %1357 = vmatpush1.msra.mxu0 %v1329
  %1358 = vmatprep.subr.mxu0 0.0
  %1359 = vmatpush1.msra.mxu0 %v1330
  %1360 = vmatprep.subr.mxu0 0.0
  %1361 = vmatpush1.msra.mxu0 %v1331
  %1362 = vmatprep.subr.mxu0 0.0
  %1363 = vmatpush1.msra.mxu0 %v1332
  %1364 = vmatprep.subr.mxu0 0.0
  %1365 = vmatpush1.msra.mxu0 %v1333
  %1366 = vmatprep.subr.mxu0 0.0
  %1367 = vmatpush1.msra.mxu0 0.0
  %1368 = vmatprep.subr.mxu0 0.0
  %1369 = vmatpush1.msra.mxu0 0.0
  %1370 = vmatprep.subr.mxu0 0.0
  %1371 = vmatpush1.msra.mxu0 0.0
  %1372 = vmatprep.subr.mxu0 0.0
  %1373 = vmatpush1.msra.mxu0 0.0
  %1374 = vmatprep.subr.mxu0 0.0
  %1375 = vmatpush1.msra.mxu0 0.0
  %1376 = vmatprep.subr.mxu0 0.0
  %1377 = vmatpush1.msra.mxu0 0.0
  %1378 = vmatprep.subr.mxu0 0.0
  %1379 = vmatpush1.msra.mxu0 0.0
  %1380 = vmatprep.subr.mxu0 0.0
  %1381 = vmatpush1.msra.mxu0 0.0
  %1382 = vmatprep.subr.mxu0 0.0
  %1383 = vmatpush1.msra.mxu0 0.0
  %1384 = vmatprep.subr.mxu0 0.0
  %1385 = vmatpush1.msra.mxu0 0.0
  %1386 = vmatprep.subr.mxu0 0.0
  %1387 = vmatpush1.msra.mxu0 0.0
  %1388 = vmatprep.subr.mxu0 0.0
  %1389 = vmatpush1.msra.mxu0 0.0
  %1390 = vmatprep.subr.mxu0 0.0
  %1391 = vmatpush1.msra.mxu0 0.0
  %1392 = vmatprep.subr.mxu0 0.0
  %1393 = vmatpush1.msra.mxu0 0.0
  %1394 = vmatprep.subr.mxu0 0.0
  %1395 = vmatpush1.msra.mxu0 0.0
  %1396 = vmatprep.subr.mxu0 0.0
  %1397 = vmatpush1.msra.mxu0 0.0
  %1398 = vmatprep.mubr.f32.mxu0 0.0
  %1399 = vmatmul.mubr.f32.gmra.mrb[0].mxu0 %v1299
  %v1400 = vpop.f32.mrb[0].mxu0
  %v1401 = vadd.f32 0.0, %v1400
  %v1402 = vpop.f32.mrb[0].mxu0
  %1403 = vmatprep.mubr.f32.mxu0 0.0
  %1404 = vmatmul.mubr.f32.gmra.mrb[0].mxu0 %v1304
  %v1405 = vpop.f32.mrb[0].mxu0
  %v1406 = vadd.f32 0.0, %v1405
  %v1407 = vpop.f32.mrb[0].mxu0
  %1408 = vmatprep.mubr.f32.mxu0 0.0
  %1409 = vmatmul.mubr.f32.gmra.mrb[0].mxu0 %v1309
  %v1410 = vpop.f32.mrb[0].mxu0
  %v1411 = vadd.f32 0.0, %v1410
  %v1412 = vpop.f32.mrb[0].mxu0
  %1413 = vmatprep.mubr.f32.mxu0 0.0
  %1414 = vmatmul.mubr.f32.gmra.mrb[0].mxu0 %v1314
  %v1415 = vpop.f32.mrb[0].mxu0
  %v1416 = vadd.f32 0.0, %v1415
  %v1417 = vpop.f32.mrb[0].mxu0
  %1418 = vdwg.mxu0
  %v1419 = vadd.f32 %v1214, %v1401
  %v1420 = vadd.f32 %v1219, %v1406
  %v1421 = vadd.f32 %v1224, %v1411
  %v1422 = vadd.f32 %v1229, %v1416
  %v1423 = vld [vmem:[%s10] sm:$0x1]
  %v1425 = vlaneseq
  %v1426 = vshrl.u32 %v1425, 7
  %v1427 = vsub.s32 0, %v1426
  %v1428 = vrot.slane %v1423, %v1427
  %v1430 = vadd.f32 %v1419, %v1428
  %v1431 = vadd.f32 %v1420, %v1428
  %v1432 = vadd.f32 %v1421, %v1428
  %v1433 = vadd.f32 %v1422, %v1428
  %v1434 = vmax.f32 %v1430, 0.0
  %v1435 = vmax.f32 %v1431, 0.0
  %v1436 = vmax.f32 %v1432, 0.0
  %v1437 = vmax.f32 %v1433, 0.0
  %v1438 = vadd.f32 %v1434, %v1435
  %v1439 = vadd.f32 %v1438, %v1436
  %v1440 = vadd.f32 %v1439, %v1437
  %v1441 = vrot.slane %v1440, 4
  %v1442 = vadd.f32 %v1440, %v1441
  %v1443 = vrot.slane %v1442, 2
  %v1444 = vadd.f32 %v1442, %v1443
  %v1445 = vrot.slane %v1444, 1
  %v1446 = vadd.f32 %v1444, %v1445
  %v1447 = vmul.f32 %v1434, %v1434
  %v1448 = vmul.f32 %v1435, %v1435
  %v1449 = vmul.f32 %v1436, %v1436
  %v1450 = vmul.f32 %v1437, %v1437
  %v1451 = vadd.f32 %v1447, %v1448
  %v1452 = vadd.f32 %v1451, %v1449
  %v1453 = vadd.f32 %v1452, %v1450
  %v1454 = vrot.slane %v1453, 4
  %v1455 = vadd.f32 %v1453, %v1454
  %v1456 = vrot.slane %v1455, 2
  %v1457 = vadd.f32 %v1455, %v1456
  %v1458 = vrot.slane %v1457, 1
  %v1459 = vadd.f32 %v1457, %v1458
  %1460 = vmatprep.subr.mxu0 0.0
  %1461 = vmatpush1.msra.mxu0 %v623
  %1462 = vmatprep.subr.mxu0 0.0
  %1463 = vmatpush1.msra.mxu0 %v624
  %1464 = vmatprep.subr.mxu0 0.0
  %1465 = vmatpush1.msra.mxu0 %v625
  %1466 = vmatprep.subr.mxu0 0.0
  %1467 = vmatpush1.msra.mxu0 %v626
  %1468 = vmatprep.subr.mxu0 0.0
  %1469 = vmatpush1.msra.mxu0 %v627
  %1470 = vmatprep.subr.mxu0 0.0
  %1471 = vmatpush1.msra.mxu0 %v628
  %1472 = vmatprep.subr.mxu0 0.0
  %1473 = vmatpush1.msra.mxu0 %v629
  %1474 = vmatprep.subr.mxu0 0.0
  %1475 = vmatpush1.msra.mxu0 %v630
  %1476 = vmatprep.subr.mxu0 0.0
  %1477 = vmatpush1.msra.mxu0 %v631
  %1478 = vmatprep.subr.mxu0 0.0
  %1479 = vmatpush1.msra.mxu0 %v632
  %1480 = vmatprep.subr.mxu0 0.0
  %1481 = vmatpush1.msra.mxu0 %v633
  %1482 = vmatprep.subr.mxu0 0.0
  %1483 = vmatpush1.msra.mxu0 %v634
  %1484 = vmatprep.subr.mxu0 0.0
  %1485 = vmatpush1.msra.mxu0 %v635
  %1486 = vmatprep.subr.mxu0 0.0
  %1487 = vmatpush1.msra.mxu0 %v636
  %1488 = vmatprep.subr.mxu0 0.0
  %1489 = vmatpush1.msra.mxu0 %v637
  %1490 = vmatprep.subr.mxu0 0.0
  %1491 = vmatpush1.msra.mxu0 %v638
  %1492 = vmatprep.subr.mxu0 0.0
  %1493 = vmatpush1.msra.mxu0 0.0
  %1494 = vmatprep.subr.mxu0 0.0
  %1495 = vmatpush1.msra.mxu0 0.0
  %1496 = vmatprep.subr.mxu0 0.0
  %1497 = vmatpush1.msra.mxu0 0.0
  %1498 = vmatprep.subr.mxu0 0.0
  %1499 = vmatpush1.msra.mxu0 0.0
  %1500 = vmatprep.subr.mxu0 0.0
  %1501 = vmatpush1.msra.mxu0 0.0
  %1502 = vmatprep.subr.mxu0 0.0
  %1503 = vmatpush1.msra.mxu0 0.0
  %1504 = vmatprep.subr.mxu0 0.0
  %1505 = vmatpush1.msra.mxu0 0.0
  %1506 = vmatprep.subr.mxu0 0.0
  %1507 = vmatpush1.msra.mxu0 0.0
  %1508 = vmatprep.subr.mxu0 0.0
  %1509 = vmatpush1.msra.mxu0 0.0
  %1510 = vmatprep.subr.mxu0 0.0
  %1511 = vmatpush1.msra.mxu0 0.0
  %1512 = vmatprep.subr.mxu0 0.0
  %1513 = vmatpush1.msra.mxu0 0.0
  %1514 = vmatprep.subr.mxu0 0.0
  %1515 = vmatpush1.msra.mxu0 0.0
  %1516 = vmatprep.subr.mxu0 0.0
  %1517 = vmatpush1.msra.mxu0 0.0
  %1518 = vmatprep.subr.mxu0 0.0
  %1519 = vmatpush1.msra.mxu0 0.0
  %1520 = vmatprep.subr.mxu0 0.0
  %1521 = vmatpush1.msra.mxu0 0.0
  %1522 = vmatprep.subr.mxu0 0.0
  %1523 = vmatpush1.msra.mxu0 0.0
  %1524 = vmatprep.mubr.f32.mxu0 0.0
  %1525 = vmatmul.mubr.f32.gmra.mrb[0].mxu0 %v1446
  %v1526 = vpop.f32.mrb[0].mxu0
  %v1527 = vadd.f32 0.0, %v1526
  %v1528 = vpop.f32.mrb[0].mxu0
  %1529 = vdwg.mxu0
  %1530 = vmatprep.subr.mxu0 0.0
  %1531 = vmatpush1.msra.mxu0 %v623
  %1532 = vmatprep.subr.mxu0 0.0
  %1533 = vmatpush1.msra.mxu0 %v624
  %1534 = vmatprep.subr.mxu0 0.0
  %1535 = vmatpush1.msra.mxu0 %v625
  %1536 = vmatprep.subr.mxu0 0.0
  %1537 = vmatpush1.msra.mxu0 %v626
  %1538 = vmatprep.subr.mxu0 0.0
  %1539 = vmatpush1.msra.mxu0 %v627
  %1540 = vmatprep.subr.mxu0 0.0
  %1541 = vmatpush1.msra.mxu0 %v628
  %1542 = vmatprep.subr.mxu0 0.0
  %1543 = vmatpush1.msra.mxu0 %v629
  %1544 = vmatprep.subr.mxu0 0.0
  %1545 = vmatpush1.msra.mxu0 %v630
  %1546 = vmatprep.subr.mxu0 0.0
  %1547 = vmatpush1.msra.mxu0 %v631
  %1548 = vmatprep.subr.mxu0 0.0
  %1549 = vmatpush1.msra.mxu0 %v632
  %1550 = vmatprep.subr.mxu0 0.0
  %1551 = vmatpush1.msra.mxu0 %v633
  %1552 = vmatprep.subr.mxu0 0.0
  %1553 = vmatpush1.msra.mxu0 %v634
  %1554 = vmatprep.subr.mxu0 0.0
  %1555 = vmatpush1.msra.mxu0 %v635
  %1556 = vmatprep.subr.mxu0 0.0
  %1557 = vmatpush1.msra.mxu0 %v636
  %1558 = vmatprep.subr.mxu0 0.0
  %1559 = vmatpush1.msra.mxu0 %v637
  %1560 = vmatprep.subr.mxu0 0.0
  %1561 = vmatpush1.msra.mxu0 %v638
  %1562 = vmatprep.subr.mxu0 0.0
  %1563 = vmatpush1.msra.mxu0 0.0
  %1564 = vmatprep.subr.mxu0 0.0
  %1565 = vmatpush1.msra.mxu0 0.0
  %1566 = vmatprep.subr.mxu0 0.0
  %1567 = vmatpush1.msra.mxu0 0.0
  %1568 = vmatprep.subr.mxu0 0.0
  %1569 = vmatpush1.msra.mxu0 0.0
  %1570 = vmatprep.subr.mxu0 0.0
  %1571 = vmatpush1.msra.mxu0 0.0
  %1572 = vmatprep.subr.mxu0 0.0
  %1573 = vmatpush1.msra.mxu0 0.0
  %1574 = vmatprep.subr.mxu0 0.0
  %1575 = vmatpush1.msra.mxu0 0.0
  %1576 = vmatprep.subr.mxu0 0.0
  %1577 = vmatpush1.msra.mxu0 0.0
  %1578 = vmatprep.subr.mxu0 0.0
  %1579 = vmatpush1.msra.mxu0 0.0
  %1580 = vmatprep.subr.mxu0 0.0
  %1581 = vmatpush1.msra.mxu0 0.0
  %1582 = vmatprep.subr.mxu0 0.0
  %1583 = vmatpush1.msra.mxu0 0.0
  %1584 = vmatprep.subr.mxu0 0.0
  %1585 = vmatpush1.msra.mxu0 0.0
  %1586 = vmatprep.subr.mxu0 0.0
  %1587 = vmatpush1.msra.mxu0 0.0
  %1588 = vmatprep.subr.mxu0 0.0
  %1589 = vmatpush1.msra.mxu0 0.0
  %1590 = vmatprep.subr.mxu0 0.0
  %1591 = vmatpush1.msra.mxu0 0.0
  %1592 = vmatprep.subr.mxu0 0.0
  %1593 = vmatpush1.msra.mxu0 0.0
  %1594 = vmatprep.mubr.f32.mxu0 0.0
  %1595 = vmatmul.mubr.f32.gmra.mrb[0].mxu0 %v1459
  %v1596 = vpop.f32.mrb[0].mxu0
  %v1597 = vadd.f32 0.0, %v1596
  %v1598 = vpop.f32.mrb[0].mxu0
  %1599 = vdwg.mxu0
  %v1600 = vmul.f32 %v1527, %v1527
  %v1601 = vsub.f32 %v1597, %v1600
  %v1602 = vlaneseq
  %v1603 = vshrl.u32 %v1602, 7
  %v1604 = vsub.s32 0, %v1603
  %v1605 = vrot.slane %v1527, %v1604
  %v1606 = vsub.f32 %v1434, %v1605
  %v1607 = vsub.f32 %v1435, %v1605
  %v1608 = vsub.f32 %v1436, %v1605
  %v1609 = vsub.f32 %v1437, %v1605
  %v1610 = vadd.f32 %v1601, 1e-05
  %v1611 = vrsqrt.pop %v1610
  %v1612 = vlaneseq
  %v1613 = vshrl.u32 %v1612, 7
  %v1614 = vsub.s32 0, %v1613
  %v1615 = vrot.slane %v1611, %v1614
  %v1616 = vmul.f32 %v1606, %v1615
  %v1617 = vmul.f32 %v1607, %v1615
  %v1618 = vmul.f32 %v1608, %v1615
  %v1619 = vmul.f32 %v1609, %v1615
  %v1620 = vld [vmem:[%s11] sm:$0x1]
  %v1622 = vlaneseq
  %v1623 = vshrl.u32 %v1622, 7
  %v1624 = vsub.s32 0, %v1623
  %v1625 = vrot.slane %v1620, %v1624
  %v1627 = vmul.f32 %v1616, %v1625
  %v1628 = vmul.f32 %v1617, %v1625
  %v1629 = vmul.f32 %v1618, %v1625
  %v1630 = vmul.f32 %v1619, %v1625
  %v1631 = vld [vmem:[%s12] sm:$0x1]
  %v1633 = vlaneseq
  %v1634 = vshrl.u32 %v1633, 7
  %v1635 = vsub.s32 0, %v1634
  %v1636 = vrot.slane %v1631, %v1635
  %v1638 = vadd.f32 %v1627, %v1636
  %v1639 = vadd.f32 %v1628, %v1636
  %v1640 = vadd.f32 %v1629, %v1636
  %v1641 = vadd.f32 %v1630, %v1636
  %v1642 = vld [vmem:[%s13] sm:$0xff]
  %v1643 = vld [vmem:[%s13 + $0x8] sm:$0xff]
  %v1645 = vsel %vm73, %v1642, 0
  %v1648 = vsel %vm73, %v1643, 0
  %1650 = vmatprep.subr.mxu0 0.0
  %1651 = vmatpush1.msra.mxu0 %v1638
  %1652 = vmatprep.subr.mxu0 0.0
  %1653 = vmatpush1.msra.mxu0 %v1639
  %1654 = vmatprep.subr.mxu0 0.0
  %1655 = vmatpush1.msra.mxu0 %v1640
  %1656 = vmatprep.subr.mxu0 0.0
  %1657 = vmatpush1.msra.mxu0 %v1641
  %1658 = vmatprep.subr.mxu0 0.0
  %1659 = vmatpush1.msra.mxu0 0.0
  %1660 = vmatprep.subr.mxu0 0.0
  %1661 = vmatpush1.msra.mxu0 0.0
  %1662 = vmatprep.subr.mxu0 0.0
  %1663 = vmatpush1.msra.mxu0 0.0
  %1664 = vmatprep.subr.mxu0 0.0
  %1665 = vmatpush1.msra.mxu0 0.0
  %1666 = vmatprep.subr.mxu0 0.0
  %1667 = vmatpush1.msra.mxu0 0.0
  %1668 = vmatprep.subr.mxu0 0.0
  %1669 = vmatpush1.msra.mxu0 0.0
  %1670 = vmatprep.subr.mxu0 0.0
  %1671 = vmatpush1.msra.mxu0 0.0
  %1672 = vmatprep.subr.mxu0 0.0
  %1673 = vmatpush1.msra.mxu0 0.0
  %1674 = vmatprep.subr.mxu0 0.0
  %1675 = vmatpush1.msra.mxu0 0.0
  %1676 = vmatprep.subr.mxu0 0.0
  %1677 = vmatpush1.msra.mxu0 0.0
  %1678 = vmatprep.subr.mxu0 0.0
  %1679 = vmatpush1.msra.mxu0 0.0
  %1680 = vmatprep.subr.mxu0 0.0
  %1681 = vmatpush1.msra.mxu0 0.0
  %1682 = vmatprep.subr.mxu0 0.0
  %1683 = vmatpush1.msra.mxu0 0.0
  %1684 = vmatprep.subr.mxu0 0.0
  %1685 = vmatpush1.msra.mxu0 0.0
  %1686 = vmatprep.subr.mxu0 0.0
  %1687 = vmatpush1.msra.mxu0 0.0
  %1688 = vmatprep.subr.mxu0 0.0
  %1689 = vmatpush1.msra.mxu0 0.0
  %1690 = vmatprep.subr.mxu0 0.0
  %1691 = vmatpush1.msra.mxu0 0.0
  %1692 = vmatprep.subr.mxu0 0.0
  %1693 = vmatpush1.msra.mxu0 0.0
  %1694 = vmatprep.subr.mxu0 0.0
  %1695 = vmatpush1.msra.mxu0 0.0
  %1696 = vmatprep.subr.mxu0 0.0
  %1697 = vmatpush1.msra.mxu0 0.0
  %1698 = vmatprep.subr.mxu0 0.0
  %1699 = vmatpush1.msra.mxu0 0.0
  %1700 = vmatprep.subr.mxu0 0.0
  %1701 = vmatpush1.msra.mxu0 0.0
  %1702 = vmatprep.subr.mxu0 0.0
  %1703 = vmatpush1.msra.mxu0 0.0
  %1704 = vmatprep.subr.mxu0 0.0
  %1705 = vmatpush1.msra.mxu0 0.0
  %1706 = vmatprep.subr.mxu0 0.0
  %1707 = vmatpush1.msra.mxu0 0.0
  %1708 = vmatprep.subr.mxu0 0.0
  %1709 = vmatpush1.msra.mxu0 0.0
  %1710 = vmatprep.subr.mxu0 0.0
  %1711 = vmatpush1.msra.mxu0 0.0
  %1712 = vmatprep.subr.mxu0 0.0
  %1713 = vmatpush1.msra.mxu0 0.0
  %1714 = vmatprep.mubr.f32.mxu0 0.0
  %1715 = vmatmul.mubr.f32.gmra.mrb[0].mxu0 %v1645
  %v1716 = vpop.f32.mrb[0].mxu0
  %v1717 = vadd.f32 0.0, %v1716
  %v1718 = vpop.f32.mrb[0].mxu0
  %1719 = vmatprep.mubr.f32.mxu0 0.0
  %1720 = vmatmul.mubr.f32.gmra.mrb[0].mxu0 %v1648
  %v1721 = vpop.f32.mrb[0].mxu0
  %v1722 = vadd.f32 0.0, %v1721
  %v1723 = vpop.f32.mrb[0].mxu0
  %1724 = vdwg.mxu0
  %v1725 = vld [vmem:[%s14] sm:$0xff]
  %v1726 = vld [vmem:[%s14 + $0x8] sm:$0xff]
  %v1727 = vld [vmem:[%s14 + $0x10] sm:$0xff]
  %v1728 = vld [vmem:[%s14 + $0x18] sm:$0xff]
  %v1729 = vld [vmem:[%s14 + $0x20] sm:$0xff]
  %v1730 = vld [vmem:[%s14 + $0x28] sm:$0xff]
  %v1731 = vld [vmem:[%s14 + $0x30] sm:$0xff]
  %v1732 = vld [vmem:[%s14 + $0x38] sm:$0xff]
  %v1733 = vld [vmem:[%s14 + $0x40] sm:$0xff]
  %v1734 = vld [vmem:[%s14 + $0x48] sm:$0xff]
  %v1735 = vld [vmem:[%s14 + $0x50] sm:$0xff]
  %v1736 = vld [vmem:[%s14 + $0x58] sm:$0xff]
  %v1737 = vld [vmem:[%s14 + $0x60] sm:$0xff]
  %v1738 = vld [vmem:[%s14 + $0x68] sm:$0xff]
  %v1739 = vld [vmem:[%s14 + $0x70] sm:$0xff]
  %v1740 = vld [vmem:[%s14 + $0x78] sm:$0xff]
  %s1741 = scalar_lea.vmem %s13, 16
  %v1742 = vld [vmem:[%s1741] sm:$0xff]
  %v1743 = vld [vmem:[%s1741 + $0x8] sm:$0xff]
  %v1745 = vsel %vm73, %v1742, 0
  %v1748 = vsel %vm73, %v1743, 0
  %1750 = vmatprep.subr.mxu0 0.0
  %1751 = vmatpush1.msra.mxu0 %v1638
  %1752 = vmatprep.subr.mxu0 0.0
  %1753 = vmatpush1.msra.mxu0 %v1639
  %1754 = vmatprep.subr.mxu0 0.0
  %1755 = vmatpush1.msra.mxu0 %v1640
  %1756 = vmatprep.subr.mxu0 0.0
  %1757 = vmatpush1.msra.mxu0 %v1641
  %1758 = vmatprep.subr.mxu0 0.0
  %1759 = vmatpush1.msra.mxu0 0.0
  %1760 = vmatprep.subr.mxu0 0.0
  %1761 = vmatpush1.msra.mxu0 0.0
  %1762 = vmatprep.subr.mxu0 0.0
  %1763 = vmatpush1.msra.mxu0 0.0
  %1764 = vmatprep.subr.mxu0 0.0
  %1765 = vmatpush1.msra.mxu0 0.0
  %1766 = vmatprep.subr.mxu0 0.0
  %1767 = vmatpush1.msra.mxu0 0.0
  %1768 = vmatprep.subr.mxu0 0.0
  %1769 = vmatpush1.msra.mxu0 0.0
  %1770 = vmatprep.subr.mxu0 0.0
  %1771 = vmatpush1.msra.mxu0 0.0
  %1772 = vmatprep.subr.mxu0 0.0
  %1773 = vmatpush1.msra.mxu0 0.0
  %1774 = vmatprep.subr.mxu0 0.0
  %1775 = vmatpush1.msra.mxu0 0.0
  %1776 = vmatprep.subr.mxu0 0.0
  %1777 = vmatpush1.msra.mxu0 0.0
  %1778 = vmatprep.subr.mxu0 0.0
  %1779 = vmatpush1.msra.mxu0 0.0
  %1780 = vmatprep.subr.mxu0 0.0
  %1781 = vmatpush1.msra.mxu0 0.0
  %1782 = vmatprep.subr.mxu0 0.0
  %1783 = vmatpush1.msra.mxu0 0.0
  %1784 = vmatprep.subr.mxu0 0.0
  %1785 = vmatpush1.msra.mxu0 0.0
  %1786 = vmatprep.subr.mxu0 0.0
  %1787 = vmatpush1.msra.mxu0 0.0
  %1788 = vmatprep.subr.mxu0 0.0
  %1789 = vmatpush1.msra.mxu0 0.0
  %1790 = vmatprep.subr.mxu0 0.0
  %1791 = vmatpush1.msra.mxu0 0.0
  %1792 = vmatprep.subr.mxu0 0.0
  %1793 = vmatpush1.msra.mxu0 0.0
  %1794 = vmatprep.subr.mxu0 0.0
  %1795 = vmatpush1.msra.mxu0 0.0
  %1796 = vmatprep.subr.mxu0 0.0
  %1797 = vmatpush1.msra.mxu0 0.0
  %1798 = vmatprep.subr.mxu0 0.0
  %1799 = vmatpush1.msra.mxu0 0.0
  %1800 = vmatprep.subr.mxu0 0.0
  %1801 = vmatpush1.msra.mxu0 0.0
  %1802 = vmatprep.subr.mxu0 0.0
  %1803 = vmatpush1.msra.mxu0 0.0
  %1804 = vmatprep.subr.mxu0 0.0
  %1805 = vmatpush1.msra.mxu0 0.0
  %1806 = vmatprep.subr.mxu0 0.0
  %1807 = vmatpush1.msra.mxu0 0.0
  %1808 = vmatprep.subr.mxu0 0.0
  %1809 = vmatpush1.msra.mxu0 0.0
  %1810 = vmatprep.subr.mxu0 0.0
  %1811 = vmatpush1.msra.mxu0 0.0
  %1812 = vmatprep.subr.mxu0 0.0
  %1813 = vmatpush1.msra.mxu0 0.0
  %1814 = vmatprep.mubr.f32.mxu0 0.0
  %1815 = vmatmul.mubr.f32.gmra.mrb[0].mxu0 %v1745
  %v1816 = vpop.f32.mrb[0].mxu0
  %v1817 = vadd.f32 0.0, %v1816
  %v1818 = vpop.f32.mrb[0].mxu0
  %1819 = vmatprep.mubr.f32.mxu0 0.0
  %1820 = vmatmul.mubr.f32.gmra.mrb[0].mxu0 %v1748
  %v1821 = vpop.f32.mrb[0].mxu0
  %v1822 = vadd.f32 0.0, %v1821
  %v1823 = vpop.f32.mrb[0].mxu0
  %1824 = vdwg.mxu0
  %s1825 = scalar_lea.vmem %s14, 128
  %v1826 = vld [vmem:[%s1825] sm:$0xff]
  %v1827 = vld [vmem:[%s1825 + $0x8] sm:$0xff]
  %v1828 = vld [vmem:[%s1825 + $0x10] sm:$0xff]
  %v1829 = vld [vmem:[%s1825 + $0x18] sm:$0xff]
  %v1830 = vld [vmem:[%s1825 + $0x20] sm:$0xff]
  %v1831 = vld [vmem:[%s1825 + $0x28] sm:$0xff]
  %v1832 = vld [vmem:[%s1825 + $0x30] sm:$0xff]
  %v1833 = vld [vmem:[%s1825 + $0x38] sm:$0xff]
  %v1834 = vld [vmem:[%s1825 + $0x40] sm:$0xff]
  %v1835 = vld [vmem:[%s1825 + $0x48] sm:$0xff]
  %v1836 = vld [vmem:[%s1825 + $0x50] sm:$0xff]
  %v1837 = vld [vmem:[%s1825 + $0x58] sm:$0xff]
  %v1838 = vld [vmem:[%s1825 + $0x60] sm:$0xff]
  %v1839 = vld [vmem:[%s1825 + $0x68] sm:$0xff]
  %v1840 = vld [vmem:[%s1825 + $0x70] sm:$0xff]
  %v1841 = vld [vmem:[%s1825 + $0x78] sm:$0xff]
  %1842 = vmatprep.subr.mxu0 0.0
  %1843 = vmatpush1.msra.mxu0 %v1826
  %1844 = vmatprep.subr.mxu0 0.0
  %1845 = vmatpush1.msra.mxu0 %v1827
  %1846 = vmatprep.subr.mxu0 0.0
  %1847 = vmatpush1.msra.mxu0 %v1828
  %1848 = vmatprep.subr.mxu0 0.0
  %1849 = vmatpush1.msra.mxu0 %v1829
  %1850 = vmatprep.subr.mxu0 0.0
  %1851 = vmatpush1.msra.mxu0 %v1830
  %1852 = vmatprep.subr.mxu0 0.0
  %1853 = vmatpush1.msra.mxu0 %v1831
  %1854 = vmatprep.subr.mxu0 0.0
  %1855 = vmatpush1.msra.mxu0 %v1832
  %1856 = vmatprep.subr.mxu0 0.0
  %1857 = vmatpush1.msra.mxu0 %v1833
  %1858 = vmatprep.subr.mxu0 0.0
  %1859 = vmatpush1.msra.mxu0 %v1834
  %1860 = vmatprep.subr.mxu0 0.0
  %1861 = vmatpush1.msra.mxu0 %v1835
  %1862 = vmatprep.subr.mxu0 0.0
  %1863 = vmatpush1.msra.mxu0 %v1836
  %1864 = vmatprep.subr.mxu0 0.0
  %1865 = vmatpush1.msra.mxu0 %v1837
  %1866 = vmatprep.subr.mxu0 0.0
  %1867 = vmatpush1.msra.mxu0 %v1838
  %1868 = vmatprep.subr.mxu0 0.0
  %1869 = vmatpush1.msra.mxu0 %v1839
  %1870 = vmatprep.subr.mxu0 0.0
  %1871 = vmatpush1.msra.mxu0 %v1840
  %1872 = vmatprep.subr.mxu0 0.0
  %1873 = vmatpush1.msra.mxu0 %v1841
  %1874 = vmatprep.subr.mxu0 0.0
  %1875 = vmatpush1.msra.mxu0 0.0
  %1876 = vmatprep.subr.mxu0 0.0
  %1877 = vmatpush1.msra.mxu0 0.0
  %1878 = vmatprep.subr.mxu0 0.0
  %1879 = vmatpush1.msra.mxu0 0.0
  %1880 = vmatprep.subr.mxu0 0.0
  %1881 = vmatpush1.msra.mxu0 0.0
  %1882 = vmatprep.subr.mxu0 0.0
  %1883 = vmatpush1.msra.mxu0 0.0
  %1884 = vmatprep.subr.mxu0 0.0
  %1885 = vmatpush1.msra.mxu0 0.0
  %1886 = vmatprep.subr.mxu0 0.0
  %1887 = vmatpush1.msra.mxu0 0.0
  %1888 = vmatprep.subr.mxu0 0.0
  %1889 = vmatpush1.msra.mxu0 0.0
  %1890 = vmatprep.subr.mxu0 0.0
  %1891 = vmatpush1.msra.mxu0 0.0
  %1892 = vmatprep.subr.mxu0 0.0
  %1893 = vmatpush1.msra.mxu0 0.0
  %1894 = vmatprep.subr.mxu0 0.0
  %1895 = vmatpush1.msra.mxu0 0.0
  %1896 = vmatprep.subr.mxu0 0.0
  %1897 = vmatpush1.msra.mxu0 0.0
  %1898 = vmatprep.subr.mxu0 0.0
  %1899 = vmatpush1.msra.mxu0 0.0
  %1900 = vmatprep.subr.mxu0 0.0
  %1901 = vmatpush1.msra.mxu0 0.0
  %1902 = vmatprep.subr.mxu0 0.0
  %1903 = vmatpush1.msra.mxu0 0.0
  %1904 = vmatprep.subr.mxu0 0.0
  %1905 = vmatpush1.msra.mxu0 0.0
  %1906 = vmatprep.mubr.f32.mxu0 0.0
  %1907 = vmatmul.mubr.f32.gmra.mrb[0].mxu0 %v1817
  %v1908 = vpop.f32.mrb[0].mxu0
  %v1909 = vadd.f32 0.0, %v1908
  %v1910 = vpop.f32.mrb[0].mxu0
  %1911 = vmatprep.mubr.f32.mxu0 0.0
  %1912 = vmatmul.mubr.f32.gmra.mrb[0].mxu0 %v1822
  %v1913 = vpop.f32.mrb[0].mxu0
  %v1914 = vadd.f32 0.0, %v1913
  %v1915 = vpop.f32.mrb[0].mxu0
  %1916 = vdwg.mxu0
  %1917 = vmatprep.subr.mxu0 0.0
  %1918 = vmatpush1.msra.mxu0 %v1725
  %1919 = vmatprep.subr.mxu0 0.0
  %1920 = vmatpush1.msra.mxu0 %v1726
  %1921 = vmatprep.subr.mxu0 0.0
  %1922 = vmatpush1.msra.mxu0 %v1727
  %1923 = vmatprep.subr.mxu0 0.0
  %1924 = vmatpush1.msra.mxu0 %v1728
  %1925 = vmatprep.subr.mxu0 0.0
  %1926 = vmatpush1.msra.mxu0 %v1729
  %1927 = vmatprep.subr.mxu0 0.0
  %1928 = vmatpush1.msra.mxu0 %v1730
  %1929 = vmatprep.subr.mxu0 0.0
  %1930 = vmatpush1.msra.mxu0 %v1731
  %1931 = vmatprep.subr.mxu0 0.0
  %1932 = vmatpush1.msra.mxu0 %v1732
  %1933 = vmatprep.subr.mxu0 0.0
  %1934 = vmatpush1.msra.mxu0 %v1733
  %1935 = vmatprep.subr.mxu0 0.0
  %1936 = vmatpush1.msra.mxu0 %v1734
  %1937 = vmatprep.subr.mxu0 0.0
  %1938 = vmatpush1.msra.mxu0 %v1735
  %1939 = vmatprep.subr.mxu0 0.0
  %1940 = vmatpush1.msra.mxu0 %v1736
  %1941 = vmatprep.subr.mxu0 0.0
  %1942 = vmatpush1.msra.mxu0 %v1737
  %1943 = vmatprep.subr.mxu0 0.0
  %1944 = vmatpush1.msra.mxu0 %v1738
  %1945 = vmatprep.subr.mxu0 0.0
  %1946 = vmatpush1.msra.mxu0 %v1739
  %1947 = vmatprep.subr.mxu0 0.0
  %1948 = vmatpush1.msra.mxu0 %v1740
  %1949 = vmatprep.subr.mxu0 0.0
  %1950 = vmatpush1.msra.mxu0 0.0
  %1951 = vmatprep.subr.mxu0 0.0
  %1952 = vmatpush1.msra.mxu0 0.0
  %1953 = vmatprep.subr.mxu0 0.0
  %1954 = vmatpush1.msra.mxu0 0.0
  %1955 = vmatprep.subr.mxu0 0.0
  %1956 = vmatpush1.msra.mxu0 0.0
  %1957 = vmatprep.subr.mxu0 0.0
  %1958 = vmatpush1.msra.mxu0 0.0
  %1959 = vmatprep.subr.mxu0 0.0
  %1960 = vmatpush1.msra.mxu0 0.0
  %1961 = vmatprep.subr.mxu0 0.0
  %1962 = vmatpush1.msra.mxu0 0.0
  %1963 = vmatprep.subr.mxu0 0.0
  %1964 = vmatpush1.msra.mxu0 0.0
  %1965 = vmatprep.subr.mxu0 0.0
  %1966 = vmatpush1.msra.mxu0 0.0
  %1967 = vmatprep.subr.mxu0 0.0
  %1968 = vmatpush1.msra.mxu0 0.0
  %1969 = vmatprep.subr.mxu0 0.0
  %1970 = vmatpush1.msra.mxu0 0.0
  %1971 = vmatprep.subr.mxu0 0.0
  %1972 = vmatpush1.msra.mxu0 0.0
  %1973 = vmatprep.subr.mxu0 0.0
  %1974 = vmatpush1.msra.mxu0 0.0
  %1975 = vmatprep.subr.mxu0 0.0
  %1976 = vmatpush1.msra.mxu0 0.0
  %1977 = vmatprep.subr.mxu0 0.0
  %1978 = vmatpush1.msra.mxu0 0.0
  %1979 = vmatprep.subr.mxu0 0.0
  %1980 = vmatpush1.msra.mxu0 0.0
  %1981 = vmatprep.mubr.f32.mxu0 0.0
  %1982 = vmatmul.mubr.f32.gmra.mrb[0].mxu0 %v1717
  %v1983 = vpop.f32.mrb[0].mxu0
  %v1984 = vadd.f32 %v1909, %v1983
  %v1985 = vpop.f32.mrb[0].mxu0
  %1986 = vmatprep.mubr.f32.mxu0 0.0
  %1987 = vmatmul.mubr.f32.gmra.mrb[0].mxu0 %v1722
  %v1988 = vpop.f32.mrb[0].mxu0
  %v1989 = vadd.f32 %v1914, %v1988
  %v1990 = vpop.f32.mrb[0].mxu0
  %1991 = vdwg.mxu0
  %s1992 = scalar_lea.vmem %s13, 32
  %v1993 = vld [vmem:[%s1992] sm:$0xff]
  %v1994 = vld [vmem:[%s1992 + $0x8] sm:$0xff]
  %v1996 = vsel %vm73, %v1993, 0
  %v1999 = vsel %vm73, %v1994, 0
  %2001 = vmatprep.subr.mxu0 0.0
  %2002 = vmatpush1.msra.mxu0 %v1638
  %2003 = vmatprep.subr.mxu0 0.0
  %2004 = vmatpush1.msra.mxu0 %v1639
  %2005 = vmatprep.subr.mxu0 0.0
  %2006 = vmatpush1.msra.mxu0 %v1640
  %2007 = vmatprep.subr.mxu0 0.0
  %2008 = vmatpush1.msra.mxu0 %v1641
  %2009 = vmatprep.subr.mxu0 0.0
  %2010 = vmatpush1.msra.mxu0 0.0
  %2011 = vmatprep.subr.mxu0 0.0
  %2012 = vmatpush1.msra.mxu0 0.0
  %2013 = vmatprep.subr.mxu0 0.0
  %2014 = vmatpush1.msra.mxu0 0.0
  %2015 = vmatprep.subr.mxu0 0.0
  %2016 = vmatpush1.msra.mxu0 0.0
  %2017 = vmatprep.subr.mxu0 0.0
  %2018 = vmatpush1.msra.mxu0 0.0
  %2019 = vmatprep.subr.mxu0 0.0
  %2020 = vmatpush1.msra.mxu0 0.0
  %2021 = vmatprep.subr.mxu0 0.0
  %2022 = vmatpush1.msra.mxu0 0.0
  %2023 = vmatprep.subr.mxu0 0.0
  %2024 = vmatpush1.msra.mxu0 0.0
  %2025 = vmatprep.subr.mxu0 0.0
  %2026 = vmatpush1.msra.mxu0 0.0
  %2027 = vmatprep.subr.mxu0 0.0
  %2028 = vmatpush1.msra.mxu0 0.0
  %2029 = vmatprep.subr.mxu0 0.0
  %2030 = vmatpush1.msra.mxu0 0.0
  %2031 = vmatprep.subr.mxu0 0.0
  %2032 = vmatpush1.msra.mxu0 0.0
  %2033 = vmatprep.subr.mxu0 0.0
  %2034 = vmatpush1.msra.mxu0 0.0
  %2035 = vmatprep.subr.mxu0 0.0
  %2036 = vmatpush1.msra.mxu0 0.0
  %2037 = vmatprep.subr.mxu0 0.0
  %2038 = vmatpush1.msra.mxu0 0.0
  %2039 = vmatprep.subr.mxu0 0.0
  %2040 = vmatpush1.msra.mxu0 0.0
  %2041 = vmatprep.subr.mxu0 0.0
  %2042 = vmatpush1.msra.mxu0 0.0
  %2043 = vmatprep.subr.mxu0 0.0
  %2044 = vmatpush1.msra.mxu0 0.0
  %2045 = vmatprep.subr.mxu0 0.0
  %2046 = vmatpush1.msra.mxu0 0.0
  %2047 = vmatprep.subr.mxu0 0.0
  %2048 = vmatpush1.msra.mxu0 0.0
  %2049 = vmatprep.subr.mxu0 0.0
  %2050 = vmatpush1.msra.mxu0 0.0
  %2051 = vmatprep.subr.mxu0 0.0
  %2052 = vmatpush1.msra.mxu0 0.0
  %2053 = vmatprep.subr.mxu0 0.0
  %2054 = vmatpush1.msra.mxu0 0.0
  %2055 = vmatprep.subr.mxu0 0.0
  %2056 = vmatpush1.msra.mxu0 0.0
  %2057 = vmatprep.subr.mxu0 0.0
  %2058 = vmatpush1.msra.mxu0 0.0
  %2059 = vmatprep.subr.mxu0 0.0
  %2060 = vmatpush1.msra.mxu0 0.0
  %2061 = vmatprep.subr.mxu0 0.0
  %2062 = vmatpush1.msra.mxu0 0.0
  %2063 = vmatprep.subr.mxu0 0.0
  %2064 = vmatpush1.msra.mxu0 0.0
  %2065 = vmatprep.mubr.f32.mxu0 0.0
  %2066 = vmatmul.mubr.f32.gmra.mrb[0].mxu0 %v1996
  %v2067 = vpop.f32.mrb[0].mxu0
  %v2068 = vadd.f32 0.0, %v2067
  %v2069 = vpop.f32.mrb[0].mxu0
  %2070 = vmatprep.mubr.f32.mxu0 0.0
  %2071 = vmatmul.mubr.f32.gmra.mrb[0].mxu0 %v1999
  %v2072 = vpop.f32.mrb[0].mxu0
  %v2073 = vadd.f32 0.0, %v2072
  %v2074 = vpop.f32.mrb[0].mxu0
  %2075 = vdwg.mxu0
  %s2076 = scalar_lea.vmem %s14, 256
  %v2077 = vld [vmem:[%s2076] sm:$0xff]
  %v2078 = vld [vmem:[%s2076 + $0x8] sm:$0xff]
  %v2079 = vld [vmem:[%s2076 + $0x10] sm:$0xff]
  %v2080 = vld [vmem:[%s2076 + $0x18] sm:$0xff]
  %v2081 = vld [vmem:[%s2076 + $0x20] sm:$0xff]
  %v2082 = vld [vmem:[%s2076 + $0x28] sm:$0xff]
  %v2083 = vld [vmem:[%s2076 + $0x30] sm:$0xff]
  %v2084 = vld [vmem:[%s2076 + $0x38] sm:$0xff]
  %v2085 = vld [vmem:[%s2076 + $0x40] sm:$0xff]
  %v2086 = vld [vmem:[%s2076 + $0x48] sm:$0xff]
  %v2087 = vld [vmem:[%s2076 + $0x50] sm:$0xff]
  %v2088 = vld [vmem:[%s2076 + $0x58] sm:$0xff]
  %v2089 = vld [vmem:[%s2076 + $0x60] sm:$0xff]
  %v2090 = vld [vmem:[%s2076 + $0x68] sm:$0xff]
  %v2091 = vld [vmem:[%s2076 + $0x70] sm:$0xff]
  %v2092 = vld [vmem:[%s2076 + $0x78] sm:$0xff]
  %2093 = vmatprep.subr.mxu0 0.0
  %2094 = vmatpush1.msra.mxu0 %v2077
  %2095 = vmatprep.subr.mxu0 0.0
  %2096 = vmatpush1.msra.mxu0 %v2078
  %2097 = vmatprep.subr.mxu0 0.0
  %2098 = vmatpush1.msra.mxu0 %v2079
  %2099 = vmatprep.subr.mxu0 0.0
  %2100 = vmatpush1.msra.mxu0 %v2080
  %2101 = vmatprep.subr.mxu0 0.0
  %2102 = vmatpush1.msra.mxu0 %v2081
  %2103 = vmatprep.subr.mxu0 0.0
  %2104 = vmatpush1.msra.mxu0 %v2082
  %2105 = vmatprep.subr.mxu0 0.0
  %2106 = vmatpush1.msra.mxu0 %v2083
  %2107 = vmatprep.subr.mxu0 0.0
  %2108 = vmatpush1.msra.mxu0 %v2084
  %2109 = vmatprep.subr.mxu0 0.0
  %2110 = vmatpush1.msra.mxu0 %v2085
  %2111 = vmatprep.subr.mxu0 0.0
  %2112 = vmatpush1.msra.mxu0 %v2086
  %2113 = vmatprep.subr.mxu0 0.0
  %2114 = vmatpush1.msra.mxu0 %v2087
  %2115 = vmatprep.subr.mxu0 0.0
  %2116 = vmatpush1.msra.mxu0 %v2088
  %2117 = vmatprep.subr.mxu0 0.0
  %2118 = vmatpush1.msra.mxu0 %v2089
  %2119 = vmatprep.subr.mxu0 0.0
  %2120 = vmatpush1.msra.mxu0 %v2090
  %2121 = vmatprep.subr.mxu0 0.0
  %2122 = vmatpush1.msra.mxu0 %v2091
  %2123 = vmatprep.subr.mxu0 0.0
  %2124 = vmatpush1.msra.mxu0 %v2092
  %2125 = vmatprep.subr.mxu0 0.0
  %2126 = vmatpush1.msra.mxu0 0.0
  %2127 = vmatprep.subr.mxu0 0.0
  %2128 = vmatpush1.msra.mxu0 0.0
  %2129 = vmatprep.subr.mxu0 0.0
  %2130 = vmatpush1.msra.mxu0 0.0
  %2131 = vmatprep.subr.mxu0 0.0
  %2132 = vmatpush1.msra.mxu0 0.0
  %2133 = vmatprep.subr.mxu0 0.0
  %2134 = vmatpush1.msra.mxu0 0.0
  %2135 = vmatprep.subr.mxu0 0.0
  %2136 = vmatpush1.msra.mxu0 0.0
  %2137 = vmatprep.subr.mxu0 0.0
  %2138 = vmatpush1.msra.mxu0 0.0
  %2139 = vmatprep.subr.mxu0 0.0
  %2140 = vmatpush1.msra.mxu0 0.0
  %2141 = vmatprep.subr.mxu0 0.0
  %2142 = vmatpush1.msra.mxu0 0.0
  %2143 = vmatprep.subr.mxu0 0.0
  %2144 = vmatpush1.msra.mxu0 0.0
  %2145 = vmatprep.subr.mxu0 0.0
  %2146 = vmatpush1.msra.mxu0 0.0
  %2147 = vmatprep.subr.mxu0 0.0
  %2148 = vmatpush1.msra.mxu0 0.0
  %2149 = vmatprep.subr.mxu0 0.0
  %2150 = vmatpush1.msra.mxu0 0.0
  %2151 = vmatprep.subr.mxu0 0.0
  %2152 = vmatpush1.msra.mxu0 0.0
  %2153 = vmatprep.subr.mxu0 0.0
  %2154 = vmatpush1.msra.mxu0 0.0
  %2155 = vmatprep.subr.mxu0 0.0
  %2156 = vmatpush1.msra.mxu0 0.0
  %2157 = vmatprep.mubr.f32.mxu0 0.0
  %2158 = vmatmul.mubr.f32.gmra.mrb[0].mxu0 %v2068
  %v2159 = vpop.f32.mrb[0].mxu0
  %v2160 = vadd.f32 0.0, %v2159
  %v2161 = vpop.f32.mrb[0].mxu0
  %2162 = vmatprep.mubr.f32.mxu0 0.0
  %2163 = vmatmul.mubr.f32.gmra.mrb[0].mxu0 %v2073
  %v2164 = vpop.f32.mrb[0].mxu0
  %v2165 = vadd.f32 0.0, %v2164
  %v2166 = vpop.f32.mrb[0].mxu0
  %2167 = vdwg.mxu0
  %v2168 = vadd.f32 %v1984, %v2160
  %v2169 = vadd.f32 %v1989, %v2165
  %s2170 = scalar_lea.vmem %s13, 48
  %v2171 = vld [vmem:[%s2170] sm:$0xff]
  %v2172 = vld [vmem:[%s2170 + $0x8] sm:$0xff]
  %v2174 = vsel %vm73, %v2171, 0
  %v2177 = vsel %vm73, %v2172, 0
  %2179 = vmatprep.subr.mxu0 0.0
  %2180 = vmatpush1.msra.mxu0 %v1638
  %2181 = vmatprep.subr.mxu0 0.0
  %2182 = vmatpush1.msra.mxu0 %v1639
  %2183 = vmatprep.subr.mxu0 0.0
  %2184 = vmatpush1.msra.mxu0 %v1640
  %2185 = vmatprep.subr.mxu0 0.0
  %2186 = vmatpush1.msra.mxu0 %v1641
  %2187 = vmatprep.subr.mxu0 0.0
  %2188 = vmatpush1.msra.mxu0 0.0
  %2189 = vmatprep.subr.mxu0 0.0
  %2190 = vmatpush1.msra.mxu0 0.0
  %2191 = vmatprep.subr.mxu0 0.0
  %2192 = vmatpush1.msra.mxu0 0.0
  %2193 = vmatprep.subr.mxu0 0.0
  %2194 = vmatpush1.msra.mxu0 0.0
  %2195 = vmatprep.subr.mxu0 0.0
  %2196 = vmatpush1.msra.mxu0 0.0
  %2197 = vmatprep.subr.mxu0 0.0
  %2198 = vmatpush1.msra.mxu0 0.0
  %2199 = vmatprep.subr.mxu0 0.0
  %2200 = vmatpush1.msra.mxu0 0.0
  %2201 = vmatprep.subr.mxu0 0.0
  %2202 = vmatpush1.msra.mxu0 0.0
  %2203 = vmatprep.subr.mxu0 0.0
  %2204 = vmatpush1.msra.mxu0 0.0
  %2205 = vmatprep.subr.mxu0 0.0
  %2206 = vmatpush1.msra.mxu0 0.0
  %2207 = vmatprep.subr.mxu0 0.0
  %2208 = vmatpush1.msra.mxu0 0.0
  %2209 = vmatprep.subr.mxu0 0.0
  %2210 = vmatpush1.msra.mxu0 0.0
  %2211 = vmatprep.subr.mxu0 0.0
  %2212 = vmatpush1.msra.mxu0 0.0
  %2213 = vmatprep.subr.mxu0 0.0
  %2214 = vmatpush1.msra.mxu0 0.0
  %2215 = vmatprep.subr.mxu0 0.0
  %2216 = vmatpush1.msra.mxu0 0.0
  %2217 = vmatprep.subr.mxu0 0.0
  %2218 = vmatpush1.msra.mxu0 0.0
  %2219 = vmatprep.subr.mxu0 0.0
  %2220 = vmatpush1.msra.mxu0 0.0
  %2221 = vmatprep.subr.mxu0 0.0
  %2222 = vmatpush1.msra.mxu0 0.0
  %2223 = vmatprep.subr.mxu0 0.0
  %2224 = vmatpush1.msra.mxu0 0.0
  %2225 = vmatprep.subr.mxu0 0.0
  %2226 = vmatpush1.msra.mxu0 0.0
  %2227 = vmatprep.subr.mxu0 0.0
  %2228 = vmatpush1.msra.mxu0 0.0
  %2229 = vmatprep.subr.mxu0 0.0
  %2230 = vmatpush1.msra.mxu0 0.0
  %2231 = vmatprep.subr.mxu0 0.0
  %2232 = vmatpush1.msra.mxu0 0.0
  %2233 = vmatprep.subr.mxu0 0.0
  %2234 = vmatpush1.msra.mxu0 0.0
  %2235 = vmatprep.subr.mxu0 0.0
  %2236 = vmatpush1.msra.mxu0 0.0
  %2237 = vmatprep.subr.mxu0 0.0
  %2238 = vmatpush1.msra.mxu0 0.0
  %2239 = vmatprep.subr.mxu0 0.0
  %2240 = vmatpush1.msra.mxu0 0.0
  %2241 = vmatprep.subr.mxu0 0.0
  %2242 = vmatpush1.msra.mxu0 0.0
  %2243 = vmatprep.mubr.f32.mxu0 0.0
  %2244 = vmatmul.mubr.f32.gmra.mrb[0].mxu0 %v2174
  %v2245 = vpop.f32.mrb[0].mxu0
  %v2246 = vadd.f32 0.0, %v2245
  %v2247 = vpop.f32.mrb[0].mxu0
  %2248 = vmatprep.mubr.f32.mxu0 0.0
  %2249 = vmatmul.mubr.f32.gmra.mrb[0].mxu0 %v2177
  %v2250 = vpop.f32.mrb[0].mxu0
  %v2251 = vadd.f32 0.0, %v2250
  %v2252 = vpop.f32.mrb[0].mxu0
  %2253 = vdwg.mxu0
  %s2254 = scalar_lea.vmem %s14, 384
  %v2255 = vld [vmem:[%s2254] sm:$0xff]
  %v2256 = vld [vmem:[%s2254 + $0x8] sm:$0xff]
  %v2257 = vld [vmem:[%s2254 + $0x10] sm:$0xff]
  %v2258 = vld [vmem:[%s2254 + $0x18] sm:$0xff]
  %v2259 = vld [vmem:[%s2254 + $0x20] sm:$0xff]
  %v2260 = vld [vmem:[%s2254 + $0x28] sm:$0xff]
  %v2261 = vld [vmem:[%s2254 + $0x30] sm:$0xff]
  %v2262 = vld [vmem:[%s2254 + $0x38] sm:$0xff]
  %v2263 = vld [vmem:[%s2254 + $0x40] sm:$0xff]
  %v2264 = vld [vmem:[%s2254 + $0x48] sm:$0xff]
  %v2265 = vld [vmem:[%s2254 + $0x50] sm:$0xff]
  %v2266 = vld [vmem:[%s2254 + $0x58] sm:$0xff]
  %v2267 = vld [vmem:[%s2254 + $0x60] sm:$0xff]
  %v2268 = vld [vmem:[%s2254 + $0x68] sm:$0xff]
  %v2269 = vld [vmem:[%s2254 + $0x70] sm:$0xff]
  %v2270 = vld [vmem:[%s2254 + $0x78] sm:$0xff]
  %2271 = vmatprep.subr.mxu0 0.0
  %2272 = vmatpush1.msra.mxu0 %v2255
  %2273 = vmatprep.subr.mxu0 0.0
  %2274 = vmatpush1.msra.mxu0 %v2256
  %2275 = vmatprep.subr.mxu0 0.0
  %2276 = vmatpush1.msra.mxu0 %v2257
  %2277 = vmatprep.subr.mxu0 0.0
  %2278 = vmatpush1.msra.mxu0 %v2258
  %2279 = vmatprep.subr.mxu0 0.0
  %2280 = vmatpush1.msra.mxu0 %v2259
  %2281 = vmatprep.subr.mxu0 0.0
  %2282 = vmatpush1.msra.mxu0 %v2260
  %2283 = vmatprep.subr.mxu0 0.0
  %2284 = vmatpush1.msra.mxu0 %v2261
  %2285 = vmatprep.subr.mxu0 0.0
  %2286 = vmatpush1.msra.mxu0 %v2262
  %2287 = vmatprep.subr.mxu0 0.0
  %2288 = vmatpush1.msra.mxu0 %v2263
  %2289 = vmatprep.subr.mxu0 0.0
  %2290 = vmatpush1.msra.mxu0 %v2264
  %2291 = vmatprep.subr.mxu0 0.0
  %2292 = vmatpush1.msra.mxu0 %v2265
  %2293 = vmatprep.subr.mxu0 0.0
  %2294 = vmatpush1.msra.mxu0 %v2266
  %2295 = vmatprep.subr.mxu0 0.0
  %2296 = vmatpush1.msra.mxu0 %v2267
  %2297 = vmatprep.subr.mxu0 0.0
  %2298 = vmatpush1.msra.mxu0 %v2268
  %2299 = vmatprep.subr.mxu0 0.0
  %2300 = vmatpush1.msra.mxu0 %v2269
  %2301 = vmatprep.subr.mxu0 0.0
  %2302 = vmatpush1.msra.mxu0 %v2270
  %2303 = vmatprep.subr.mxu0 0.0
  %2304 = vmatpush1.msra.mxu0 0.0
  %2305 = vmatprep.subr.mxu0 0.0
  %2306 = vmatpush1.msra.mxu0 0.0
  %2307 = vmatprep.subr.mxu0 0.0
  %2308 = vmatpush1.msra.mxu0 0.0
  %2309 = vmatprep.subr.mxu0 0.0
  %2310 = vmatpush1.msra.mxu0 0.0
  %2311 = vmatprep.subr.mxu0 0.0
  %2312 = vmatpush1.msra.mxu0 0.0
  %2313 = vmatprep.subr.mxu0 0.0
  %2314 = vmatpush1.msra.mxu0 0.0
  %2315 = vmatprep.subr.mxu0 0.0
  %2316 = vmatpush1.msra.mxu0 0.0
  %2317 = vmatprep.subr.mxu0 0.0
  %2318 = vmatpush1.msra.mxu0 0.0
  %2319 = vmatprep.subr.mxu0 0.0
  %2320 = vmatpush1.msra.mxu0 0.0
  %2321 = vmatprep.subr.mxu0 0.0
  %2322 = vmatpush1.msra.mxu0 0.0
  %2323 = vmatprep.subr.mxu0 0.0
  %2324 = vmatpush1.msra.mxu0 0.0
  %2325 = vmatprep.subr.mxu0 0.0
  %2326 = vmatpush1.msra.mxu0 0.0
  %2327 = vmatprep.subr.mxu0 0.0
  %2328 = vmatpush1.msra.mxu0 0.0
  %2329 = vmatprep.subr.mxu0 0.0
  %2330 = vmatpush1.msra.mxu0 0.0
  %2331 = vmatprep.subr.mxu0 0.0
  %2332 = vmatpush1.msra.mxu0 0.0
  %2333 = vmatprep.subr.mxu0 0.0
  %2334 = vmatpush1.msra.mxu0 0.0
  %2335 = vmatprep.mubr.f32.mxu0 0.0
  %2336 = vmatmul.mubr.f32.gmra.mrb[0].mxu0 %v2246
  %v2337 = vpop.f32.mrb[0].mxu0
  %v2338 = vadd.f32 0.0, %v2337
  %v2339 = vpop.f32.mrb[0].mxu0
  %2340 = vmatprep.mubr.f32.mxu0 0.0
  %2341 = vmatmul.mubr.f32.gmra.mrb[0].mxu0 %v2251
  %v2342 = vpop.f32.mrb[0].mxu0
  %v2343 = vadd.f32 0.0, %v2342
  %v2344 = vpop.f32.mrb[0].mxu0
  %2345 = vdwg.mxu0
  %v2346 = vadd.f32 %v2168, %v2338
  %v2347 = vadd.f32 %v2169, %v2343
  %v2348 = vld [vmem:[%s15] sm:$0x1]
  %v2350 = vlaneseq
  %v2351 = vshrl.u32 %v2350, 7
  %v2352 = vsub.s32 0, %v2351
  %v2353 = vrot.slane %v2348, %v2352
  %v2355 = vadd.f32 %v2346, %v2353
  %v2356 = vadd.f32 %v2347, %v2353
  %2357 = vst.msk [vmem:[%s17] sm:$0xff] %vm179, %v2355
  %2358 = vst.msk [vmem:[%s17 + $0x8] sm:$0xff] %vm179, %v2356
  // Predicated region
  $region70: #{block_forward.1} parent=0 // pred_check
    _
  $region71: #{block_forward.1} parent=0 // pred_check_branch
    %2360 = sbr.rel (0) target = $region73
  $region72: #{block_forward.1} parent=0 // pred_region
    _
  $region73: #{block_forward.1} parent=0 // pred_fallthru
    _
  // Predicated region
  $region74: #{block_forward.1} parent=0 // pred_check
    _
  $region75: #{block_forward.1} parent=0 // pred_check_branch
    %2362 = sbr.rel (0) target = $region77
  $region76: #{block_forward.1} parent=0 // pred_region
    _
  $region77: #{block_forward.1} parent=0 // pred_fallthru
    _

</llo_original>
